<compile_context>
chip_gen: v6e
topology: v6e:2x2x1
jax: 0.10.0
libtpu: 0.0.40
codegen_flags: <defaults>
</compile_context>

<pallas_src>
import math
from functools import partial

import jax
import jax.numpy as jnp
from jax.experimental import pallas as pl
from jax.experimental.pallas import tpu as pltpu


# -----------------------------------------------------------------------------
# Fused kernel: gate + expert-mix + q/k/v projection + MHA + w_o + residual + LN
# One grid step per batch element; everything stays in VMEM.
# -----------------------------------------------------------------------------
def _fused_mha_kernel(x_ref, q_ref, k_ref, v_ref,
                      fc1w_ref, fc1b_ref, fc2w_ref, fc2b_ref,
                      wall_ref, wo_ref, wob_ref, g_ref, beta_ref,
                      o_ref, *attn_refs,
                      n_head, d_k, d_v, num_experts, inv_temper, eps,
                      emit_attn, mm_dtype):
    HDk = n_head * d_k

    def mm(a, b):
        # Cast MXU operands (bf16 at production on v6e/v7x), accumulate f32.
        return jnp.dot(a.astype(mm_dtype), b.astype(mm_dtype),
                       preferred_element_type=jnp.float32)

    # ---- TransformAttention gate: mean -> fc1 -> ReLU -> fc2 -> sigmoid ----
    x = x_ref[0]                                           # (S, D)
    m = jnp.mean(x, axis=0, keepdims=True)                 # (1, D)
    h = jnp.maximum(mm(m, fc1w_ref[...]) + fc1b_ref[...], 0.0)
    gate = jax.nn.sigmoid(mm(h, fc2w_ref[...]) + fc2b_ref[...])   # (1, K)

    # ---- Expert mixing: mixed(D, 3*H*dk) = sum_k gate_k * W_k (VPU MACs) ----
    mixed = gate[:, 0:1] * wall_ref[0]                     # (1,1)*(D,3*HDk)
    for kk in range(1, num_experts):
        mixed = mixed + gate[:, kk:kk + 1] * wall_ref[kk]

    Mq = mixed[:, 0:HDk]
    Mk = mixed[:, HDk:2 * HDk]
    Mv = mixed[:, 2 * HDk:]

    q_in = q_ref[0]                                        # (T, D)
    k_in = k_ref[0]
    v_in = v_ref[0]

    # All heads projected together; 1/temper folded into q.
    qs = mm(q_in, Mq) * inv_temper                         # (T, H*dk)
    ks = mm(k_in, Mk)
    vs = mm(v_in, Mv)

    # Start the output-projection accumulator with w_o bias + residual.
    y = q_in + wob_ref[...]                                # (T, D)

    # TODO(synk): switch to lax.fori_loop when n_head grows (>4) to bound
    # per-head live ranges.
    for hh in range(n_head):
        qh = qs[:, hh * d_k:(hh + 1) * d_k]                # (T, dk)
        kh = ks[:, hh * d_k:(hh + 1) * d_k]
        vh = vs[:, hh * d_v:(hh + 1) * d_v]

        # scores = q @ k^T (transpose folded into the MXU via dot_general NT)
        s = jax.lax.dot_general(qh.astype(mm_dtype), kh.astype(mm_dtype),
                                (((1,), (1,)), ((), ())),
                                preferred_element_type=jnp.float32)   # (T, T)
        s = s - jnp.max(s, axis=-1, keepdims=True)
        p = jnp.exp(s)
        p = p * pl.reciprocal(jnp.sum(p, axis=-1, keepdims=True), approx=False)
        if emit_attn:
            attn_refs[0][hh, 0] = p.astype(attn_refs[0].dtype)

        head_h = mm(p, vh)                                 # (T, dv)
        # Head-concat + w_o done as per-head partial matmuls (no concat).
        y = y + mm(head_h, wo_ref[hh * d_v:(hh + 1) * d_v, :])

    # ---- LayerNorm(d_model) ----
    mu = jnp.mean(y, axis=-1, keepdims=True)
    var = jnp.mean(jnp.square(y - mu), axis=-1, keepdims=True)
    yn = (y - mu) * jax.lax.rsqrt(var + eps)
    o_ref[0] = (yn * g_ref[...] + beta_ref[...]).astype(o_ref.dtype)


# -----------------------------------------------------------------------------
# Forward wrapper (only trace-time concat/reshapes outside the kernel)
# -----------------------------------------------------------------------------
def multi_head_attention(q, k, v, x_, params, *, n_head, d_k, d_v, d_model,
                         num_experts, mask=None, return_attn=True,
                         matmul_dtype=jnp.float32):
    del mask  # ignored, exactly as in the PyTorch reference
    assert d_k == d_v, "PyTorch reshape1 implicitly requires d_k == d_v"
    B, T, D = q.shape
    S = x_.shape[1]
    K = num_experts
    HDk = n_head * d_k
    HDv = n_head * d_v
    C3 = 2 * HDk + HDv

    # Interleave the three expert weight banks: (K, D, 3*H*dk), Wq|Wk|Wv along
    # the last (lane) axis so the mixed weight is a single lane-dense slab.
    w_all = jnp.concatenate([params["wq"], params["wk"], params["wv"]], axis=2)

    kern = partial(_fused_mha_kernel, n_head=n_head, d_k=d_k, d_v=d_v,
                   num_experts=K, inv_temper=1.0 / math.sqrt(d_model),
                   eps=1e-5, emit_attn=return_attn, mm_dtype=matmul_dtype)

    out_shape = [jax.ShapeDtypeStruct((B, T, D), jnp.float32)]
    out_specs = [pl.BlockSpec((1, T, D), lambda b: (b, 0, 0))]
    if return_attn:
        # Head-major layout so the wrapper reshape to (H*B, T, T) is free.
        out_shape.append(jax.ShapeDtypeStruct((n_head, B, T, T), jnp.float32))
        out_specs.append(pl.BlockSpec((n_head, 1, T, T), lambda b: (0, b, 0, 0)))

    in_specs = [
        pl.BlockSpec((1, S, D), lambda b: (b, 0, 0)),     # x_
        pl.BlockSpec((1, T, D), lambda b: (b, 0, 0)),     # q
        pl.BlockSpec((1, T, D), lambda b: (b, 0, 0)),     # k
        pl.BlockSpec((1, T, D), lambda b: (b, 0, 0)),     # v
        pl.BlockSpec((D, K), lambda b: (0, 0)),           # fc1_w
        pl.BlockSpec((1, K), lambda b: (0, 0)),           # fc1_b
        pl.BlockSpec((K, K), lambda b: (0, 0)),           # fc2_w
        pl.BlockSpec((1, K), lambda b: (0, 0)),           # fc2_b
        pl.BlockSpec((K, D, C3), lambda b: (0, 0, 0)),    # w_all (expert banks)
        pl.BlockSpec((HDv, D), lambda b: (0, 0)),         # wo_w
        pl.BlockSpec((1, D), lambda b: (0, 0)),           # wo_b
        pl.BlockSpec((1, D), lambda b: (0, 0)),           # ln_g
        pl.BlockSpec((1, D), lambda b: (0, 0)),           # ln_b
    ]

    res = pl.pallas_call(
        kern,
        out_shape=out_shape,
        grid=(B,),
        in_specs=in_specs,
        out_specs=out_specs,
        compiler_params=pltpu.CompilerParams(dimension_semantics=("parallel",)),
    )(x_, q, k, v,
      params["fc1_w"], params["fc1_b"].reshape(1, K),
      params["fc2_w"], params["fc2_b"].reshape(1, K),
      w_all, params["wo_w"], params["wo_b"].reshape(1, D),
      params["ln_g"].reshape(1, D), params["ln_b"].reshape(1, D))

    if return_attn:
        out, attn4 = res
        # (H, B, T, T) -> (H*B, T, T): matches PyTorch reshape1 head-major order.
        return out, attn4.reshape(n_head * B, T, T)
    (out,) = res
    return out, None


# -----------------------------------------------------------------------------
# Pure-JAX reference (sanity check only)
# -----------------------------------------------------------------------------
def reference(q, k, v, x_, p, *, n_head, d_k, d_v, d_model):
    hp = jax.lax.Precision.HIGHEST
    a = jax.nn.sigmoid(
        jnp.maximum(jnp.mean(x_, 1) @ p["fc1_w"] + p["fc1_b"], 0.0) @ p["fc2_w"] + p["fc2_b"])

    def dyn(inp, W):
        mixed = jnp.einsum("be,edc->bdc", a, W, precision=hp)
        return jnp.einsum("btd,bdc->btc", inp, mixed, precision=hp)

    qs, ks, vs = dyn(q, p["wq"]), dyn(k, p["wk"]), dyn(v, p["wv"])

    def r1(x, dh):
        Bx, Tx, _ = x.shape
        return jnp.transpose(x.reshape(Bx, Tx, n_head, dh), (2, 0, 1, 3)).reshape(n_head * Bx, Tx, dh)

    qs, ks, vs = r1(qs, d_k), r1(ks, d_k), r1(vs, d_v)
    s = jnp.einsum("bid,bjd->bij", qs, ks, precision=hp) / math.sqrt(d_model)
    pm = jax.nn.softmax(s, axis=-1)
    head = jnp.einsum("bij,bjd->bid", pm, vs, precision=hp)
    HB, T, _ = head.shape
    head = jnp.transpose(head.reshape(n_head, HB // n_head, T, d_v), (1, 2, 0, 3))
    head = head.reshape(HB // n_head, T, n_head * d_v)
    y = jnp.einsum("btc,cd->btd", head, p["wo_w"], precision=hp) + p["wo_b"] + q
    mu = jnp.mean(y, -1, keepdims=True)
    var = jnp.mean((y - mu) ** 2, -1, keepdims=True)
    out = (y - mu) / jnp.sqrt(var + 1e-5) * p["ln_g"] + p["ln_b"]
    return out, pm


if __name__ == "__main__":
    # small, shape-consistent config
    B, T, S = 2, 8, 8
    d_model = 32
    n_head, d_k, d_v = 2, 8, 8
    num_experts = 4

    key = jax.random.PRNGKey(0)
    ks_ = jax.random.split(key, 12)

    HDk = n_head * d_k
    HDv = n_head * d_v
    # wq/wk/wv hold qs_layer.weight.t() already reshaped+permuted to (K, d_model, H*dk)
    params = {
        "wq": 0.1 * jax.random.normal(ks_[0], (num_experts, d_model, HDk), jnp.float32),
        "wk": 0.1 * jax.random.normal(ks_[1], (num_experts, d_model, HDk), jnp.float32),
        "wv": 0.1 * jax.random.normal(ks_[2], (num_experts, d_model, HDv), jnp.float32),
        "fc1_w": 0.1 * jax.random.normal(ks_[3], (d_model, num_experts), jnp.float32),
        "fc1_b": 0.1 * jax.random.normal(ks_[4], (num_experts,), jnp.float32),
        "fc2_w": 0.1 * jax.random.normal(ks_[5], (num_experts, num_experts), jnp.float32),
        "fc2_b": 0.1 * jax.random.normal(ks_[6], (num_experts,), jnp.float32),
        "wo_w": 0.1 * jax.random.normal(ks_[7], (HDv, d_model), jnp.float32),
        "wo_b": 0.1 * jax.random.normal(ks_[8], (d_model,), jnp.float32),
        "ln_g": jnp.ones((d_model,), jnp.float32),
        "ln_b": jnp.zeros((d_model,), jnp.float32),
    }

    q = jax.random.normal(ks_[9], (B, T, d_model), jnp.float32)
    k = jax.random.normal(ks_[10], (B, T, d_model), jnp.float32)
    v = jax.random.normal(ks_[11], (B, T, d_model), jnp.float32)
    x_ = q  # transform-attention conditioning input (B, S, d_model)

    out, attn = multi_head_attention(q, k, v, x_, params,
                                     n_head=n_head, d_k=d_k, d_v=d_v,
                                     d_model=d_model, num_experts=num_experts)
    out = jax.block_until_ready(out)
    attn = jax.block_until_ready(attn)

    ref_out, ref_attn = reference(q, k, v, x_, params,
                                  n_head=n_head, d_k=d_k, d_v=d_v, d_model=d_model)
    assert out.shape == (B, T, d_model) and attn.shape == (n_head * B, T, T)
    assert jnp.allclose(out, ref_out, rtol=2e-3, atol=2e-3), "output mismatch"
    assert jnp.allclose(attn, ref_attn, rtol=2e-3, atol=2e-3), "attn mismatch"

    # attn-free fast path (drops the largest HBM writeback stream)
    out2, attn_none = multi_head_attention(q, k, v, x_, params,
                                           n_head=n_head, d_k=d_k, d_v=d_v,
                                           d_model=d_model, num_experts=num_experts,
                                           return_attn=False)
    out2 = jax.block_until_ready(out2)
    assert attn_none is None
    assert jnp.allclose(out2, ref_out, rtol=2e-3, atol=2e-3), "attn-free output mismatch"

    print("KERNEL_OK")
</pallas_src>

<mosaic_0001>
module attributes {stable_mosaic.version = 11 : i64} {
  func.func @_fused_mha_kernel(%arg0: i32, %arg1: memref<1x8x32xf32, #tpu.memory_space<vmem>>, %arg2: memref<1x8x32xf32, #tpu.memory_space<vmem>>, %arg3: memref<1x8x32xf32, #tpu.memory_space<vmem>>, %arg4: memref<1x8x32xf32, #tpu.memory_space<vmem>>, %arg5: memref<32x4xf32, #tpu.memory_space<vmem>>, %arg6: memref<1x4xf32, #tpu.memory_space<vmem>>, %arg7: memref<4x4xf32, #tpu.memory_space<vmem>>, %arg8: memref<1x4xf32, #tpu.memory_space<vmem>>, %arg9: memref<4x32x48xf32, #tpu.memory_space<vmem>>, %arg10: memref<16x32xf32, #tpu.memory_space<vmem>>, %arg11: memref<1x32xf32, #tpu.memory_space<vmem>>, %arg12: memref<1x32xf32, #tpu.memory_space<vmem>>, %arg13: memref<1x32xf32, #tpu.memory_space<vmem>>, %arg14: memref<1x8x32xf32, #tpu.memory_space<vmem>>, %arg15: memref<2x1x8x8xf32, #tpu.memory_space<vmem>>) attributes {dimension_semantics = [#tpu.dimension_semantics<parallel>], iteration_bounds = array<i64: 2>, scalar_prefetch = 0 : i64, scratch_operands = 0 : i64, tpu.core_type = #tpu.core_type<tc>, window_params = [{transform_indices = @transform_0, window_bounds = array<i64: 1, 8, 32>}, {transform_indices = @transform_1, window_bounds = array<i64: 1, 8, 32>}, {transform_indices = @transform_2, window_bounds = array<i64: 1, 8, 32>}, {transform_indices = @transform_3, window_bounds = array<i64: 1, 8, 32>}, {pipeline_mode = #tpu.pipeline_mode<synchronous>, transform_indices = @transform_4, window_bounds = array<i64: 32, 4>}, {pipeline_mode = #tpu.pipeline_mode<synchronous>, transform_indices = @transform_5, window_bounds = array<i64: 1, 4>}, {pipeline_mode = #tpu.pipeline_mode<synchronous>, transform_indices = @transform_6, window_bounds = array<i64: 4, 4>}, {pipeline_mode = #tpu.pipeline_mode<synchronous>, transform_indices = @transform_7, window_bounds = array<i64: 1, 4>}, {pipeline_mode = #tpu.pipeline_mode<synchronous>, transform_indices = @transform_8, window_bounds = array<i64: 4, 32, 48>}, {pipeline_mode = #tpu.pipeline_mode<synchronous>, transform_indices = @transform_9, window_bounds = array<i64: 16, 32>}, {pipeline_mode = #tpu.pipeline_mode<synchronous>, transform_indices = @transform_10, window_bounds = array<i64: 1, 32>}, {pipeline_mode = #tpu.pipeline_mode<synchronous>, transform_indices = @transform_11, window_bounds = array<i64: 1, 32>}, {pipeline_mode = #tpu.pipeline_mode<synchronous>, transform_indices = @transform_12, window_bounds = array<i64: 1, 32>}, {transform_indices = @transform_13, window_bounds = array<i64: 1, 8, 32>}, {transform_indices = @transform_14, window_bounds = array<i64: 2, 1, 8, 8>}]} {
    %c0 = arith.constant 0 : index
    %c0_0 = arith.constant 0 : index
    %c0_1 = arith.constant 0 : index
    %0 = vector.load %arg1[%c0, %c0_0, %c0_1] : memref<1x8x32xf32, #tpu.memory_space<vmem>>, vector<1x8x32xf32>
    %1 = vector.shape_cast %0 : vector<1x8x32xf32> to vector<8x32xf32>
    %cst = arith.constant dense<0.000000e+00> : vector<32xf32>
    %2 = vector.multi_reduction <add>, %1, %cst [0] : vector<8x32xf32> to vector<32xf32>
    %3 = vector.shape_cast %2 : vector<32xf32> to vector<1x32xf32>
    %cst_2 = arith.constant 8.000000e+00 : f32
    %4 = vector.broadcast %cst_2 : f32 to vector<1x32xf32>
    %5 = arith.divf %3, %4 : vector<1x32xf32>
    %c0_3 = arith.constant 0 : index
    %c0_4 = arith.constant 0 : index
    %6 = vector.load %arg5[%c0_3, %c0_4] : memref<32x4xf32, #tpu.memory_space<vmem>>, vector<32x4xf32>
    %cst_5 = arith.constant dense<0.000000e+00> : vector<1x4xf32>
    %7 = tpu.matmul %5, %6, %cst_5 {dimension_numbers = #tpu.dot_dimension_numbers<[1], [0], [0], [1], [0, 0, 1, 1], [], []>} : vector<1x32xf32>, vector<32x4xf32>, vector<1x4xf32> -> vector<1x4xf32>
    %c0_6 = arith.constant 0 : index
    %c0_7 = arith.constant 0 : index
    %8 = vector.load %arg6[%c0_6, %c0_7] : memref<1x4xf32, #tpu.memory_space<vmem>>, vector<1x4xf32>
    %9 = arith.addf %7, %8 : vector<1x4xf32>
    %cst_8 = arith.constant 0.000000e+00 : f32
    %10 = vector.broadcast %cst_8 : f32 to vector<1x4xf32>
    %11 = arith.maximumf %9, %10 : vector<1x4xf32>
    %c0_9 = arith.constant 0 : index
    %c0_10 = arith.constant 0 : index
    %12 = vector.load %arg7[%c0_9, %c0_10] : memref<4x4xf32, #tpu.memory_space<vmem>>, vector<4x4xf32>
    %cst_11 = arith.constant dense<0.000000e+00> : vector<1x4xf32>
    %13 = tpu.matmul %11, %12, %cst_11 {dimension_numbers = #tpu.dot_dimension_numbers<[1], [0], [0], [1], [0, 0, 1, 1], [], []>} : vector<1x4xf32>, vector<4x4xf32>, vector<1x4xf32> -> vector<1x4xf32>
    %c0_12 = arith.constant 0 : index
    %c0_13 = arith.constant 0 : index
    %14 = vector.load %arg8[%c0_12, %c0_13] : memref<1x4xf32, #tpu.memory_space<vmem>>, vector<1x4xf32>
    %15 = arith.addf %13, %14 : vector<1x4xf32>
    %16 = arith.negf %15 : vector<1x4xf32>
    %17 = math.exp %16 : vector<1x4xf32>
    %cst_14 = arith.constant 1.000000e+00 : f32
    %18 = vector.broadcast %cst_14 : f32 to vector<1x4xf32>
    %19 = arith.addf %18, %17 : vector<1x4xf32>
    %20 = arith.divf %18, %19 : vector<1x4xf32>
    %21 = vector.extract_strided_slice %20 {offsets = [0, 0], sizes = [1, 1], strides = [1, 1]} : vector<1x4xf32> to vector<1x1xf32>
    %c0_15 = arith.constant 0 : index
    %c0_16 = arith.constant 0 : index
    %c0_17 = arith.constant 0 : index
    %22 = vector.load %arg9[%c0_15, %c0_16, %c0_17] : memref<4x32x48xf32, #tpu.memory_space<vmem>>, vector<1x32x48xf32>
    %23 = vector.shape_cast %22 : vector<1x32x48xf32> to vector<32x48xf32>
    %24 = vector.broadcast %21 : vector<1x1xf32> to vector<32x48xf32>
    %25 = arith.mulf %24, %23 : vector<32x48xf32>
    %26 = vector.extract_strided_slice %20 {offsets = [0, 1], sizes = [1, 1], strides = [1, 1]} : vector<1x4xf32> to vector<1x1xf32>
    %c1 = arith.constant 1 : index
    %c0_18 = arith.constant 0 : index
    %c0_19 = arith.constant 0 : index
    %27 = vector.load %arg9[%c1, %c0_18, %c0_19] : memref<4x32x48xf32, #tpu.memory_space<vmem>>, vector<1x32x48xf32>
    %28 = vector.shape_cast %27 : vector<1x32x48xf32> to vector<32x48xf32>
    %29 = vector.broadcast %26 : vector<1x1xf32> to vector<32x48xf32>
    %30 = arith.mulf %29, %28 : vector<32x48xf32>
    %31 = arith.addf %25, %30 : vector<32x48xf32>
    %32 = vector.extract_strided_slice %20 {offsets = [0, 2], sizes = [1, 1], strides = [1, 1]} : vector<1x4xf32> to vector<1x1xf32>
    %c2 = arith.constant 2 : index
    %c0_20 = arith.constant 0 : index
    %c0_21 = arith.constant 0 : index
    %33 = vector.load %arg9[%c2, %c0_20, %c0_21] : memref<4x32x48xf32, #tpu.memory_space<vmem>>, vector<1x32x48xf32>
    %34 = vector.shape_cast %33 : vector<1x32x48xf32> to vector<32x48xf32>
    %35 = vector.broadcast %32 : vector<1x1xf32> to vector<32x48xf32>
    %36 = arith.mulf %35, %34 : vector<32x48xf32>
    %37 = arith.addf %31, %36 : vector<32x48xf32>
    %38 = vector.extract_strided_slice %20 {offsets = [0, 3], sizes = [1, 1], strides = [1, 1]} : vector<1x4xf32> to vector<1x1xf32>
    %c3 = arith.constant 3 : index
    %c0_22 = arith.constant 0 : index
    %c0_23 = arith.constant 0 : index
    %39 = vector.load %arg9[%c3, %c0_22, %c0_23] : memref<4x32x48xf32, #tpu.memory_space<vmem>>, vector<1x32x48xf32>
    %40 = vector.shape_cast %39 : vector<1x32x48xf32> to vector<32x48xf32>
    %41 = vector.broadcast %38 : vector<1x1xf32> to vector<32x48xf32>
    %42 = arith.mulf %41, %40 : vector<32x48xf32>
    %43 = arith.addf %37, %42 : vector<32x48xf32>
    %44 = vector.extract_strided_slice %43 {offsets = [0, 0], sizes = [32, 16], strides = [1, 1]} : vector<32x48xf32> to vector<32x16xf32>
    %45 = vector.extract_strided_slice %43 {offsets = [0, 16], sizes = [32, 16], strides = [1, 1]} : vector<32x48xf32> to vector<32x16xf32>
    %46 = vector.extract_strided_slice %43 {offsets = [0, 32], sizes = [32, 16], strides = [1, 1]} : vector<32x48xf32> to vector<32x16xf32>
    %c0_24 = arith.constant 0 : index
    %c0_25 = arith.constant 0 : index
    %c0_26 = arith.constant 0 : index
    %47 = vector.load %arg2[%c0_24, %c0_25, %c0_26] : memref<1x8x32xf32, #tpu.memory_space<vmem>>, vector<1x8x32xf32>
    %48 = vector.shape_cast %47 : vector<1x8x32xf32> to vector<8x32xf32>
    %c0_27 = arith.constant 0 : index
    %c0_28 = arith.constant 0 : index
    %c0_29 = arith.constant 0 : index
    %49 = vector.load %arg3[%c0_27, %c0_28, %c0_29] : memref<1x8x32xf32, #tpu.memory_space<vmem>>, vector<1x8x32xf32>
    %50 = vector.shape_cast %49 : vector<1x8x32xf32> to vector<8x32xf32>
    %c0_30 = arith.constant 0 : index
    %c0_31 = arith.constant 0 : index
    %c0_32 = arith.constant 0 : index
    %51 = vector.load %arg4[%c0_30, %c0_31, %c0_32] : memref<1x8x32xf32, #tpu.memory_space<vmem>>, vector<1x8x32xf32>
    %52 = vector.shape_cast %51 : vector<1x8x32xf32> to vector<8x32xf32>
    %cst_33 = arith.constant dense<0.000000e+00> : vector<8x16xf32>
    %53 = tpu.matmul %48, %44, %cst_33 {dimension_numbers = #tpu.dot_dimension_numbers<[1], [0], [0], [1], [0, 0, 1, 1], [], []>} : vector<8x32xf32>, vector<32x16xf32>, vector<8x16xf32> -> vector<8x16xf32>
    %cst_34 = arith.constant 0.176776692 : f32
    %54 = vector.broadcast %cst_34 : f32 to vector<8x16xf32>
    %55 = arith.mulf %53, %54 : vector<8x16xf32>
    %cst_35 = arith.constant dense<0.000000e+00> : vector<8x16xf32>
    %56 = tpu.matmul %50, %45, %cst_35 {dimension_numbers = #tpu.dot_dimension_numbers<[1], [0], [0], [1], [0, 0, 1, 1], [], []>} : vector<8x32xf32>, vector<32x16xf32>, vector<8x16xf32> -> vector<8x16xf32>
    %cst_36 = arith.constant dense<0.000000e+00> : vector<8x16xf32>
    %57 = tpu.matmul %52, %46, %cst_36 {dimension_numbers = #tpu.dot_dimension_numbers<[1], [0], [0], [1], [0, 0, 1, 1], [], []>} : vector<8x32xf32>, vector<32x16xf32>, vector<8x16xf32> -> vector<8x16xf32>
    %c0_37 = arith.constant 0 : index
    %c0_38 = arith.constant 0 : index
    %58 = vector.load %arg11[%c0_37, %c0_38] : memref<1x32xf32, #tpu.memory_space<vmem>>, vector<1x32xf32>
    %59 = vector.broadcast %58 : vector<1x32xf32> to vector<8x32xf32>
    %60 = arith.addf %48, %59 : vector<8x32xf32>
    %61 = vector.extract_strided_slice %55 {offsets = [0, 0], sizes = [8, 8], strides = [1, 1]} : vector<8x16xf32> to vector<8x8xf32>
    %62 = vector.extract_strided_slice %56 {offsets = [0, 0], sizes = [8, 8], strides = [1, 1]} : vector<8x16xf32> to vector<8x8xf32>
    %63 = vector.extract_strided_slice %57 {offsets = [0, 0], sizes = [8, 8], strides = [1, 1]} : vector<8x16xf32> to vector<8x8xf32>
    %cst_39 = arith.constant dense<0.000000e+00> : vector<8x8xf32>
    %64 = tpu.matmul %61, %62, %cst_39 {dimension_numbers = #tpu.dot_dimension_numbers<[1], [1], [0], [0], [0, 0, 1, 0], [], []>} : vector<8x8xf32>, vector<8x8xf32>, vector<8x8xf32> -> vector<8x8xf32>
    %cst_40 = arith.constant dense<0xFF800000> : vector<8xf32>
    %65 = vector.multi_reduction <maximumf>, %64, %cst_40 [1] : vector<8x8xf32> to vector<8xf32>
    %66 = vector.shape_cast %65 : vector<8xf32> to vector<8x1xf32>
    %67 = vector.broadcast %66 : vector<8x1xf32> to vector<8x8xf32>
    %68 = arith.subf %64, %67 : vector<8x8xf32>
    %69 = math.exp %68 : vector<8x8xf32>
    %cst_41 = arith.constant dense<0.000000e+00> : vector<8xf32>
    %70 = vector.multi_reduction <add>, %69, %cst_41 [1] : vector<8x8xf32> to vector<8xf32>
    %71 = vector.shape_cast %70 : vector<8xf32> to vector<8x1xf32>
    %72 = tpu.reciprocal %71 : vector<8x1xf32> -> vector<8x1xf32>
    %73 = vector.broadcast %72 : vector<8x1xf32> to vector<8x8xf32>
    %74 = arith.mulf %69, %73 : vector<8x8xf32>
    %c0_42 = arith.constant 0 : index
    %c0_43 = arith.constant 0 : index
    %c0_44 = arith.constant 0 : index
    %c0_45 = arith.constant 0 : index
    %75 = vector.load %arg15[%c0_42, %c0_43, %c0_44, %c0_45] : memref<2x1x8x8xf32, #tpu.memory_space<vmem>>, vector<1x1x8x8xf32>
    %76 = vector.shape_cast %75 : vector<1x1x8x8xf32> to vector<8x8xf32>
    %77 = vector.shape_cast %74 : vector<8x8xf32> to vector<1x1x8x8xf32>
    tpu.vector_store %arg15[%c0_42, %c0_43, %c0_44, %c0_45], %77 {strides = array<i32>} : memref<2x1x8x8xf32, #tpu.memory_space<vmem>>, vector<1x1x8x8xf32>,
    %cst_46 = arith.constant dense<0.000000e+00> : vector<8x8xf32>
    %78 = tpu.matmul %74, %63, %cst_46 {dimension_numbers = #tpu.dot_dimension_numbers<[1], [0], [0], [1], [0, 0, 1, 1], [], []>} : vector<8x8xf32>, vector<8x8xf32>, vector<8x8xf32> -> vector<8x8xf32>
    %c0_47 = arith.constant 0 : index
    %c0_48 = arith.constant 0 : index
    %79 = vector.load %arg10[%c0_47, %c0_48] : memref<16x32xf32, #tpu.memory_space<vmem>>, vector<8x32xf32>
    %cst_49 = arith.constant dense<0.000000e+00> : vector<8x32xf32>
    %80 = tpu.matmul %78, %79, %cst_49 {dimension_numbers = #tpu.dot_dimension_numbers<[1], [0], [0], [1], [0, 0, 1, 1], [], []>} : vector<8x8xf32>, vector<8x32xf32>, vector<8x32xf32> -> vector<8x32xf32>
    %81 = arith.addf %60, %80 : vector<8x32xf32>
    %82 = vector.extract_strided_slice %55 {offsets = [0, 8], sizes = [8, 8], strides = [1, 1]} : vector<8x16xf32> to vector<8x8xf32>
    %83 = vector.extract_strided_slice %56 {offsets = [0, 8], sizes = [8, 8], strides = [1, 1]} : vector<8x16xf32> to vector<8x8xf32>
    %84 = vector.extract_strided_slice %57 {offsets = [0, 8], sizes = [8, 8], strides = [1, 1]} : vector<8x16xf32> to vector<8x8xf32>
    %cst_50 = arith.constant dense<0.000000e+00> : vector<8x8xf32>
    %85 = tpu.matmul %82, %83, %cst_50 {dimension_numbers = #tpu.dot_dimension_numbers<[1], [1], [0], [0], [0, 0, 1, 0], [], []>} : vector<8x8xf32>, vector<8x8xf32>, vector<8x8xf32> -> vector<8x8xf32>
    %cst_51 = arith.constant dense<0xFF800000> : vector<8xf32>
    %86 = vector.multi_reduction <maximumf>, %85, %cst_51 [1] : vector<8x8xf32> to vector<8xf32>
    %87 = vector.shape_cast %86 : vector<8xf32> to vector<8x1xf32>
    %88 = vector.broadcast %87 : vector<8x1xf32> to vector<8x8xf32>
    %89 = arith.subf %85, %88 : vector<8x8xf32>
    %90 = math.exp %89 : vector<8x8xf32>
    %cst_52 = arith.constant dense<0.000000e+00> : vector<8xf32>
    %91 = vector.multi_reduction <add>, %90, %cst_52 [1] : vector<8x8xf32> to vector<8xf32>
    %92 = vector.shape_cast %91 : vector<8xf32> to vector<8x1xf32>
    %93 = tpu.reciprocal %92 : vector<8x1xf32> -> vector<8x1xf32>
    %94 = vector.broadcast %93 : vector<8x1xf32> to vector<8x8xf32>
    %95 = arith.mulf %90, %94 : vector<8x8xf32>
    %c1_53 = arith.constant 1 : index
    %c0_54 = arith.constant 0 : index
    %c0_55 = arith.constant 0 : index
    %c0_56 = arith.constant 0 : index
    %96 = vector.load %arg15[%c1_53, %c0_54, %c0_55, %c0_56] : memref<2x1x8x8xf32, #tpu.memory_space<vmem>>, vector<1x1x8x8xf32>
    %97 = vector.shape_cast %96 : vector<1x1x8x8xf32> to vector<8x8xf32>
    %98 = vector.shape_cast %95 : vector<8x8xf32> to vector<1x1x8x8xf32>
    tpu.vector_store %arg15[%c1_53, %c0_54, %c0_55, %c0_56], %98 {strides = array<i32>} : memref<2x1x8x8xf32, #tpu.memory_space<vmem>>, vector<1x1x8x8xf32>,
    %cst_57 = arith.constant dense<0.000000e+00> : vector<8x8xf32>
    %99 = tpu.matmul %95, %84, %cst_57 {dimension_numbers = #tpu.dot_dimension_numbers<[1], [0], [0], [1], [0, 0, 1, 1], [], []>} : vector<8x8xf32>, vector<8x8xf32>, vector<8x8xf32> -> vector<8x8xf32>
    %c8 = arith.constant 8 : index
    %c0_58 = arith.constant 0 : index
    %100 = vector.load %arg10[%c8, %c0_58] : memref<16x32xf32, #tpu.memory_space<vmem>>, vector<8x32xf32>
    %cst_59 = arith.constant dense<0.000000e+00> : vector<8x32xf32>
    %101 = tpu.matmul %99, %100, %cst_59 {dimension_numbers = #tpu.dot_dimension_numbers<[1], [0], [0], [1], [0, 0, 1, 1], [], []>} : vector<8x8xf32>, vector<8x32xf32>, vector<8x32xf32> -> vector<8x32xf32>
    %102 = arith.addf %81, %101 : vector<8x32xf32>
    %cst_60 = arith.constant dense<0.000000e+00> : vector<8xf32>
    %103 = vector.multi_reduction <add>, %102, %cst_60 [1] : vector<8x32xf32> to vector<8xf32>
    %104 = vector.shape_cast %103 : vector<8xf32> to vector<8x1xf32>
    %cst_61 = arith.constant 3.200000e+01 : f32
    %105 = vector.broadcast %cst_61 : f32 to vector<8x1xf32>
    %106 = arith.divf %104, %105 : vector<8x1xf32>
    %107 = vector.broadcast %106 : vector<8x1xf32> to vector<8x32xf32>
    %108 = arith.subf %102, %107 : vector<8x32xf32>
    %109 = arith.mulf %108, %108 : vector<8x32xf32>
    %cst_62 = arith.constant dense<0.000000e+00> : vector<8xf32>
    %110 = vector.multi_reduction <add>, %109, %cst_62 [1] : vector<8x32xf32> to vector<8xf32>
    %111 = vector.shape_cast %110 : vector<8xf32> to vector<8x1xf32>
    %cst_63 = arith.constant 3.200000e+01 : f32
    %112 = vector.broadcast %cst_63 : f32 to vector<8x1xf32>
    %113 = arith.divf %111, %112 : vector<8x1xf32>
    %114 = vector.broadcast %106 : vector<8x1xf32> to vector<8x32xf32>
    %115 = arith.subf %102, %114 : vector<8x32xf32>
    %cst_64 = arith.constant 9.99999974E-6 : f32
    %116 = vector.broadcast %cst_64 : f32 to vector<8x1xf32>
    %117 = arith.addf %113, %116 : vector<8x1xf32>
    %118 = math.rsqrt %117 : vector<8x1xf32>
    %119 = vector.broadcast %118 : vector<8x1xf32> to vector<8x32xf32>
    %120 = arith.mulf %115, %119 : vector<8x32xf32>
    %c0_65 = arith.constant 0 : index
    %c0_66 = arith.constant 0 : index
    %121 = vector.load %arg12[%c0_65, %c0_66] : memref<1x32xf32, #tpu.memory_space<vmem>>, vector<1x32xf32>
    %122 = vector.broadcast %121 : vector<1x32xf32> to vector<8x32xf32>
    %123 = arith.mulf %120, %122 : vector<8x32xf32>
    %c0_67 = arith.constant 0 : index
    %c0_68 = arith.constant 0 : index
    %124 = vector.load %arg13[%c0_67, %c0_68] : memref<1x32xf32, #tpu.memory_space<vmem>>, vector<1x32xf32>
    %125 = vector.broadcast %124 : vector<1x32xf32> to vector<8x32xf32>
    %126 = arith.addf %123, %125 : vector<8x32xf32>
    %c0_69 = arith.constant 0 : index
    %c0_70 = arith.constant 0 : index
    %c0_71 = arith.constant 0 : index
    %127 = vector.load %arg14[%c0_69, %c0_70, %c0_71] : memref<1x8x32xf32, #tpu.memory_space<vmem>>, vector<1x8x32xf32>
    %128 = vector.shape_cast %127 : vector<1x8x32xf32> to vector<8x32xf32>
    %129 = vector.shape_cast %126 : vector<8x32xf32> to vector<1x8x32xf32>
    tpu.vector_store %arg14[%c0_69, %c0_70, %c0_71], %129 {strides = array<i32>} : memref<1x8x32xf32, #tpu.memory_space<vmem>>, vector<1x8x32xf32>,
    return
  }
  func.func @transform_0(%arg0: i32) -> (i32, i32, i32) {
    %c0_i32 = arith.constant 0 : i32
    %c0_i32_0 = arith.constant 0 : i32
    %c0_i32_1 = arith.constant 0 : i32
    return %arg0, %c0_i32, %c0_i32_0 : i32, i32, i32
  }
  func.func @transform_1(%arg0: i32) -> (i32, i32, i32) {
    %c0_i32 = arith.constant 0 : i32
    %c0_i32_0 = arith.constant 0 : i32
    %c0_i32_1 = arith.constant 0 : i32
    return %arg0, %c0_i32, %c0_i32_0 : i32, i32, i32
  }
  func.func @transform_2(%arg0: i32) -> (i32, i32, i32) {
    %c0_i32 = arith.constant 0 : i32
    %c0_i32_0 = arith.constant 0 : i32
    %c0_i32_1 = arith.constant 0 : i32
    return %arg0, %c0_i32, %c0_i32_0 : i32, i32, i32
  }
  func.func @transform_3(%arg0: i32) -> (i32, i32, i32) {
    %c0_i32 = arith.constant 0 : i32
    %c0_i32_0 = arith.constant 0 : i32
    %c0_i32_1 = arith.constant 0 : i32
    return %arg0, %c0_i32, %c0_i32_0 : i32, i32, i32
  }
  func.func @transform_4(%arg0: i32) -> (i32, i32) {
    %c0_i32 = arith.constant 0 : i32
    %c0_i32_0 = arith.constant 0 : i32
    %c0_i32_1 = arith.constant 0 : i32
    return %c0_i32, %c0_i32_0 : i32, i32
  }
  func.func @transform_5(%arg0: i32) -> (i32, i32) {
    %c0_i32 = arith.constant 0 : i32
    %c0_i32_0 = arith.constant 0 : i32
    %c0_i32_1 = arith.constant 0 : i32
    return %c0_i32, %c0_i32_0 : i32, i32
  }
  func.func @transform_6(%arg0: i32) -> (i32, i32) {
    %c0_i32 = arith.constant 0 : i32
    %c0_i32_0 = arith.constant 0 : i32
    %c0_i32_1 = arith.constant 0 : i32
    return %c0_i32, %c0_i32_0 : i32, i32
  }
  func.func @transform_7(%arg0: i32) -> (i32, i32) {
    %c0_i32 = arith.constant 0 : i32
    %c0_i32_0 = arith.constant 0 : i32
    %c0_i32_1 = arith.constant 0 : i32
    return %c0_i32, %c0_i32_0 : i32, i32
  }
  func.func @transform_8(%arg0: i32) -> (i32, i32, i32) {
    %c0_i32 = arith.constant 0 : i32
    %c0_i32_0 = arith.constant 0 : i32
    %c0_i32_1 = arith.constant 0 : i32
    %c0_i32_2 = arith.constant 0 : i32
    return %c0_i32, %c0_i32_0, %c0_i32_1 : i32, i32, i32
  }
  func.func @transform_9(%arg0: i32) -> (i32, i32) {
    %c0_i32 = arith.constant 0 : i32
    %c0_i32_0 = arith.constant 0 : i32
    %c0_i32_1 = arith.constant 0 : i32
    return %c0_i32, %c0_i32_0 : i32, i32
  }
  func.func @transform_10(%arg0: i32) -> (i32, i32) {
    %c0_i32 = arith.constant 0 : i32
    %c0_i32_0 = arith.constant 0 : i32
    %c0_i32_1 = arith.constant 0 : i32
    return %c0_i32, %c0_i32_0 : i32, i32
  }
  func.func @transform_11(%arg0: i32) -> (i32, i32) {
    %c0_i32 = arith.constant 0 : i32
    %c0_i32_0 = arith.constant 0 : i32
    %c0_i32_1 = arith.constant 0 : i32
    return %c0_i32, %c0_i32_0 : i32, i32
  }
  func.func @transform_12(%arg0: i32) -> (i32, i32) {
    %c0_i32 = arith.constant 0 : i32
    %c0_i32_0 = arith.constant 0 : i32
    %c0_i32_1 = arith.constant 0 : i32
    return %c0_i32, %c0_i32_0 : i32, i32
  }
  func.func @transform_13(%arg0: i32) -> (i32, i32, i32) {
    %c0_i32 = arith.constant 0 : i32
    %c0_i32_0 = arith.constant 0 : i32
    %c0_i32_1 = arith.constant 0 : i32
    return %arg0, %c0_i32, %c0_i32_0 : i32, i32, i32
  }
  func.func @transform_14(%arg0: i32) -> (i32, i32, i32, i32) {
    %c0_i32 = arith.constant 0 : i32
    %c0_i32_0 = arith.constant 0 : i32
    %c0_i32_1 = arith.constant 0 : i32
    %c0_i32_2 = arith.constant 0 : i32
    return %c0_i32, %arg0, %c0_i32_0, %c0_i32_1 : i32, i32, i32, i32
  }
}

</mosaic_0001>

<llo_original>
// kernel: tpu_custom_call.1
$region0: #{tpu_custom_call.1}
  #allocation0 [shape = 'u32[]', space=smem, size = 0x4, offset = 0x4, fixed_abs, tag = 'smem constant byte address 0x4 - core index']
  #allocation1 [shape = 'u32[144,128]{1,0:T(1,128)}', space=vmem, size = 0x12000, scoped, tag = 'internal scratch']
  %s0 = inlined_call_operand.vmem [shape: f32[2,8,32], index: 0, kind: input, shape index: {}]
  %s1 = inlined_call_operand.vmem [shape: f32[2,8,32], index: 1, kind: input, shape index: {}]
  %s2 = inlined_call_operand.hbm [shape: f32[2,8,32], index: 2, kind: input, shape index: {}]
  %s3 = inlined_call_operand.hbm [shape: f32[2,8,32], index: 3, kind: input, shape index: {}]
  %s4 = inlined_call_operand.vmem [shape: f32[32,4], index: 4, kind: input, shape index: {}]
  %s5 = inlined_call_operand.hbm [shape: f32[1,4], index: 5, kind: input, shape index: {}]
  %s6 = inlined_call_operand.hbm [shape: f32[4,4], index: 6, kind: input, shape index: {}]
  %s7 = inlined_call_operand.hbm [shape: f32[1,4], index: 7, kind: input, shape index: {}]
  %s8 = inlined_call_operand.hbm [shape: f32[4,32,48], index: 8, kind: input, shape index: {}]
  %s9 = inlined_call_operand.vmem [shape: f32[16,32], index: 9, kind: input, shape index: {}]
  %s10 = inlined_call_operand.vmem [shape: f32[1,32], index: 10, kind: input, shape index: {}]
  %s11 = inlined_call_operand.vmem [shape: f32[1,32], index: 11, kind: input, shape index: {}]
  %s12 = inlined_call_operand.vmem [shape: f32[1,32], index: 12, kind: input, shape index: {}]
  %s13 = inlined_call_operand.hbm [shape: f32[2,8,32], index: 13, kind: output, shape index: {0}]
  %s14 = inlined_call_operand.hbm [shape: f32[2,2,8,8], index: 14, kind: output, shape index: {1}]
  %15 = xla_tuple %s13, %s14
  %s16 = sld [smem:[#allocation0]]
  $region117: #{tpu_custom_call.1} parent=0
    _
  %s18 = ssub.s32 1, %s16
  %s19 = scalar_select 0, %s18, %s16
  $region1: #{tpu_custom_call.1} parent=0
    #allocation2 [shape = 'u8[8192]{0}', space=vmem, size = 0x2000, scoped, tag = 'input window, operand 2']
    #allocation3 [shape = 's32[2]{0}', space=sflag, size = 0x8, scoped, tag = 'scoped memory for tpu_custom_call.1']
    #allocation4 [shape = 's32[2]{0}', space=sflag, size = 0x8, scoped, tag = 'scoped memory for tpu_custom_call.1']
    #allocation5 [shape = 'u8[8192]{0}', space=vmem, size = 0x2000, scoped, tag = 'input window, operand 3']
    #allocation6 [shape = 's32[2]{0}', space=sflag, size = 0x8, scoped, tag = 'scoped memory for tpu_custom_call.1']
    #allocation7 [shape = 'u8[512]{0}', space=vmem, size = 0x400, scoped, tag = 'input window, operand 5, single buffered']
    #allocation8 [shape = 'u8[2048]{0}', space=vmem, size = 0x800, scoped, tag = 'input window, operand 6, single buffered']
    #allocation9 [shape = 's32[1]{0}', space=sflag, size = 0x4, scoped, tag = 'scoped memory for tpu_custom_call.1']
    #allocation10 [shape = 'u8[512]{0}', space=vmem, size = 0x400, scoped, tag = 'input window, operand 7, single buffered']
    #allocation11 [shape = 'u8[65536]{0}', space=vmem, size = 0x10000, scoped, tag = 'input window, operand 8, single buffered']
    #allocation12 [shape = 's32[1]{0}', space=sflag, size = 0x4, scoped, tag = 'scoped memory for tpu_custom_call.1']
    #allocation13 [shape = 'u8[8192]{0}', space=vmem, size = 0x2000, scoped, tag = 'output window, operand 0']
    #allocation14 [shape = 'u8[16384]{0}', space=vmem, size = 0x4000, scoped, tag = 'output window, operand 1']
    #allocation15 [shape = 's32[2]{0}', space=sflag, size = 0x8, scoped, tag = 'scoped memory for tpu_custom_call.1']
    %20 = vsyncpa [#allocation3], 0
    %s21 = scalar_lea.sflag [#allocation3], 1
    %22 = vsyncpa %s21, 0
    %23 = vsyncpa [#allocation6], 0
    %s24 = scalar_lea.sflag [#allocation6], 1
    %25 = vsyncpa %s24, 0
    %26 = vsyncpa [#allocation9], 0
    %27 = vsyncpa [#allocation12], 0
    %28 = vsyncpa [#allocation4], 0
    %s29 = scalar_lea.sflag [#allocation4], 1
    %30 = vsyncpa %s29, 0
    %31 = vsyncpa [#allocation15], 0
    %s32 = scalar_lea.sflag [#allocation15], 1
    %33 = vsyncpa %s32, 0
    loop: start=0, step=1, limit=4
    $region2: #{tpu_custom_call.1} parent=1 // loop_pre_header
      _
    $region3: #{tpu_custom_call.1} parent=1 // loop_header
      %s35 = sphi 0, %s39
      %p36 = scmp.ge.s32.totalorder %s35, 4
      %s45 = sphi 0, %s47
      %s48 = sphi 0, %s45
      %s49 = sphi 0, %s48
      %s65 = sphi 0, %s49
      %s71 = sphi 0, %s73
      %s74 = sphi 0, %s71
      %s75 = sphi 0, %s74
      %s91 = sphi 0, %s75
      %s97 = sphi 0, %s99
      %s100 = sphi 0, %s97
      %s101 = sphi 0, %s100
      %s117 = sphi 0, %s101
      %s123 = sphi 0, %s125
      %s126 = sphi 0, %s123
      %s127 = sphi 0, %s126
      %s143 = sphi 0, %s127
      %s147 = sphi 0, %s147
      %s149 = sphi 0, %s147
      %s150 = sphi 0, %s149
      %s164 = sphi 0, %s150
      %s168 = sphi 0, %s168
      %s170 = sphi 0, %s168
      %s171 = sphi 0, %s170
      %s185 = sphi 0, %s171
      %s189 = sphi 0, %s189
      %s191 = sphi 0, %s189
      %s192 = sphi 0, %s191
      %s206 = sphi 0, %s192
      %s210 = sphi 0, %s210
      %s212 = sphi 0, %s210
      %s213 = sphi 0, %s212
      %s227 = sphi 0, %s213
      %s231 = sphi 0, %s231
      %s233 = sphi 0, %s231
      %s234 = sphi 0, %s233
      %s248 = sphi 0, %s234
      %s252 = sphi 0, %s252
      %s254 = sphi 0, %s252
      %s255 = sphi 0, %s254
      %s269 = sphi 0, %s255
      %s273 = sphi 0, %s273
      %s275 = sphi 0, %s273
      %s276 = sphi 0, %s275
      %s290 = sphi 0, %s276
      %s294 = sphi 0, %s294
      %s296 = sphi 0, %s294
      %s297 = sphi 0, %s296
      %s311 = sphi 0, %s297
      %s315 = sphi 0, %s315
      %s317 = sphi 0, %s315
      %s318 = sphi 0, %s317
      %s332 = sphi 0, %s318
      %s338 = sphi 0, %s340
      %s341 = sphi 0, %s338
      %s342 = sphi 0, %s341
      %s358 = sphi 0, %s342
      %s364 = sphi 0, %s366
      %s367 = sphi 0, %s364
      %s368 = sphi 0, %s367
      %s384 = sphi 0, %s368
    $region4: #{tpu_custom_call.1} parent=1 // loop_header_branch
      %38 = sbr.rel (%p36) target = $region8
    $region5: #{tpu_custom_call.1} parent=1 // loop_body
      %s40 = ssub.s32 %s35, 1
      %s41 = ssub.s32 %s35, 2
      %s42 = sadd.s32 %s35, 1
      %s43 = ssub.s32 %s35, %s42
      %p44 = scmp.eq.s32.totalorder %s43, 0
      %s46 = sadd.s32 %s45, 1
      %s47 = scalar_select %p44, %s45, %s46
      %p50 = pneg %p44
      %p51 = scmp.eq.s32.totalorder %s35, 1
      %p52 = por %p50, %p51
      %p53 = scmp.ne.s32.totalorder %s45, %s48
      %p54 = scmp.eq.s32.totalorder %s35, 0
      %p55 = por %p53, %p54
      %p56 = scmp.ne.s32.totalorder %s45, %s48
      %p57 = scmp.eq.s32.totalorder %s40, 1
      %p58 = por %p56, %p57
      %p59 = scmp.ne.s32.totalorder %s48, %s49
      %p60 = scmp.eq.s32.totalorder %s40, 0
      %p61 = por %p59, %p60
      %p62 = scmp.ne.s32.totalorder %s48, %s49
      %p63 = scmp.eq.s32.totalorder %s41, 1
      %p64 = por %p62, %p63
      %p66 = scmp.ne.s32.totalorder %s49, %s65
      %p67 = scmp.eq.s32.totalorder %s41, 0
      %p68 = por %p66, %p67
      %s69 = ssub.s32 %s35, %s42
      %p70 = scmp.eq.s32.totalorder %s69, 0
      %s72 = sadd.s32 %s71, 1
      %s73 = scalar_select %p70, %s71, %s72
      %p76 = pneg %p70
      %p77 = scmp.eq.s32.totalorder %s35, 1
      %p78 = por %p76, %p77
      %p79 = scmp.ne.s32.totalorder %s71, %s74
      %p80 = scmp.eq.s32.totalorder %s35, 0
      %p81 = por %p79, %p80
      %p82 = scmp.ne.s32.totalorder %s71, %s74
      %p83 = scmp.eq.s32.totalorder %s40, 1
      %p84 = por %p82, %p83
      %p85 = scmp.ne.s32.totalorder %s74, %s75
      %p86 = scmp.eq.s32.totalorder %s40, 0
      %p87 = por %p85, %p86
      %p88 = scmp.ne.s32.totalorder %s74, %s75
      %p89 = scmp.eq.s32.totalorder %s41, 1
      %p90 = por %p88, %p89
      %p92 = scmp.ne.s32.totalorder %s75, %s91
      %p93 = scmp.eq.s32.totalorder %s41, 0
      %p94 = por %p92, %p93
      %s95 = ssub.s32 %s35, %s42
      %p96 = scmp.eq.s32.totalorder %s95, 0
      %s98 = sadd.s32 %s97, 1
      %s99 = scalar_select %p96, %s97, %s98
      %p102 = pneg %p96
      %p103 = scmp.eq.s32.totalorder %s35, 1
      %p104 = por %p102, %p103
      %p105 = scmp.ne.s32.totalorder %s97, %s100
      %p106 = scmp.eq.s32.totalorder %s35, 0
      %p107 = por %p105, %p106
      %p108 = scmp.ne.s32.totalorder %s97, %s100
      %p109 = scmp.eq.s32.totalorder %s40, 1
      %p110 = por %p108, %p109
      %p111 = scmp.ne.s32.totalorder %s100, %s101
      %p112 = scmp.eq.s32.totalorder %s40, 0
      %p113 = por %p111, %p112
      %p114 = scmp.ne.s32.totalorder %s100, %s101
      %p115 = scmp.eq.s32.totalorder %s41, 1
      %p116 = por %p114, %p115
      %p118 = scmp.ne.s32.totalorder %s101, %s117
      %p119 = scmp.eq.s32.totalorder %s41, 0
      %p120 = por %p118, %p119
      %s121 = ssub.s32 %s35, %s42
      %p122 = scmp.eq.s32.totalorder %s121, 0
      %s124 = sadd.s32 %s123, 1
      %s125 = scalar_select %p122, %s123, %s124
      %p128 = pneg %p122
      %p129 = scmp.eq.s32.totalorder %s35, 1
      %p130 = por %p128, %p129
      %p131 = scmp.ne.s32.totalorder %s123, %s126
      %p132 = scmp.eq.s32.totalorder %s35, 0
      %p133 = por %p131, %p132
      %p134 = scmp.ne.s32.totalorder %s123, %s126
      %p135 = scmp.eq.s32.totalorder %s40, 1
      %p136 = por %p134, %p135
      %p137 = scmp.ne.s32.totalorder %s126, %s127
      %p138 = scmp.eq.s32.totalorder %s40, 0
      %p139 = por %p137, %p138
      %p140 = scmp.ne.s32.totalorder %s126, %s127
      %p141 = scmp.eq.s32.totalorder %s41, 1
      %p142 = por %p140, %p141
      %p144 = scmp.ne.s32.totalorder %s127, %s143
      %p145 = scmp.eq.s32.totalorder %s41, 0
      %p146 = por %p144, %p145
      %s148 = sadd.s32 %s147, 1
      %p151 = scmp.eq.s32.totalorder %s35, 1
      %p152 = scmp.ne.s32.totalorder %s147, %s149
      %p153 = scmp.eq.s32.totalorder %s35, 0
      %p154 = por %p152, %p153
      %p155 = scmp.ne.s32.totalorder %s147, %s149
      %p156 = scmp.eq.s32.totalorder %s40, 1
      %p157 = por %p155, %p156
      %p158 = scmp.ne.s32.totalorder %s149, %s150
      %p159 = scmp.eq.s32.totalorder %s40, 0
      %p160 = por %p158, %p159
      %p161 = scmp.ne.s32.totalorder %s149, %s150
      %p162 = scmp.eq.s32.totalorder %s41, 1
      %p163 = por %p161, %p162
      %p165 = scmp.ne.s32.totalorder %s150, %s164
      %p166 = scmp.eq.s32.totalorder %s41, 0
      %p167 = por %p165, %p166
      %s169 = sadd.s32 %s168, 1
      %p172 = scmp.eq.s32.totalorder %s35, 1
      %p173 = scmp.ne.s32.totalorder %s168, %s170
      %p174 = scmp.eq.s32.totalorder %s35, 0
      %p175 = por %p173, %p174
      %p176 = scmp.ne.s32.totalorder %s168, %s170
      %p177 = scmp.eq.s32.totalorder %s40, 1
      %p178 = por %p176, %p177
      %p179 = scmp.ne.s32.totalorder %s170, %s171
      %p180 = scmp.eq.s32.totalorder %s40, 0
      %p181 = por %p179, %p180
      %p182 = scmp.ne.s32.totalorder %s170, %s171
      %p183 = scmp.eq.s32.totalorder %s41, 1
      %p184 = por %p182, %p183
      %p186 = scmp.ne.s32.totalorder %s171, %s185
      %p187 = scmp.eq.s32.totalorder %s41, 0
      %p188 = por %p186, %p187
      %s190 = sadd.s32 %s189, 1
      %p193 = scmp.eq.s32.totalorder %s35, 1
      %p194 = scmp.ne.s32.totalorder %s189, %s191
      %p195 = scmp.eq.s32.totalorder %s35, 0
      %p196 = por %p194, %p195
      %p197 = scmp.ne.s32.totalorder %s189, %s191
      %p198 = scmp.eq.s32.totalorder %s40, 1
      %p199 = por %p197, %p198
      %p200 = scmp.ne.s32.totalorder %s191, %s192
      %p201 = scmp.eq.s32.totalorder %s40, 0
      %p202 = por %p200, %p201
      %p203 = scmp.ne.s32.totalorder %s191, %s192
      %p204 = scmp.eq.s32.totalorder %s41, 1
      %p205 = por %p203, %p204
      %p207 = scmp.ne.s32.totalorder %s192, %s206
      %p208 = scmp.eq.s32.totalorder %s41, 0
      %p209 = por %p207, %p208
      %s211 = sadd.s32 %s210, 1
      %p214 = scmp.eq.s32.totalorder %s35, 1
      %p215 = scmp.ne.s32.totalorder %s210, %s212
      %p216 = scmp.eq.s32.totalorder %s35, 0
      %p217 = por %p215, %p216
      %p218 = scmp.ne.s32.totalorder %s210, %s212
      %p219 = scmp.eq.s32.totalorder %s40, 1
      %p220 = por %p218, %p219
      %p221 = scmp.ne.s32.totalorder %s212, %s213
      %p222 = scmp.eq.s32.totalorder %s40, 0
      %p223 = por %p221, %p222
      %p224 = scmp.ne.s32.totalorder %s212, %s213
      %p225 = scmp.eq.s32.totalorder %s41, 1
      %p226 = por %p224, %p225
      %p228 = scmp.ne.s32.totalorder %s213, %s227
      %p229 = scmp.eq.s32.totalorder %s41, 0
      %p230 = por %p228, %p229
      %s232 = sadd.s32 %s231, 1
      %p235 = scmp.eq.s32.totalorder %s35, 1
      %p236 = scmp.ne.s32.totalorder %s231, %s233
      %p237 = scmp.eq.s32.totalorder %s35, 0
      %p238 = por %p236, %p237
      %p239 = scmp.ne.s32.totalorder %s231, %s233
      %p240 = scmp.eq.s32.totalorder %s40, 1
      %p241 = por %p239, %p240
      %p242 = scmp.ne.s32.totalorder %s233, %s234
      %p243 = scmp.eq.s32.totalorder %s40, 0
      %p244 = por %p242, %p243
      %p245 = scmp.ne.s32.totalorder %s233, %s234
      %p246 = scmp.eq.s32.totalorder %s41, 1
      %p247 = por %p245, %p246
      %p249 = scmp.ne.s32.totalorder %s234, %s248
      %p250 = scmp.eq.s32.totalorder %s41, 0
      %p251 = por %p249, %p250
      %s253 = sadd.s32 %s252, 1
      %p256 = scmp.eq.s32.totalorder %s35, 1
      %p257 = scmp.ne.s32.totalorder %s252, %s254
      %p258 = scmp.eq.s32.totalorder %s35, 0
      %p259 = por %p257, %p258
      %p260 = scmp.ne.s32.totalorder %s252, %s254
      %p261 = scmp.eq.s32.totalorder %s40, 1
      %p262 = por %p260, %p261
      %p263 = scmp.ne.s32.totalorder %s254, %s255
      %p264 = scmp.eq.s32.totalorder %s40, 0
      %p265 = por %p263, %p264
      %p266 = scmp.ne.s32.totalorder %s254, %s255
      %p267 = scmp.eq.s32.totalorder %s41, 1
      %p268 = por %p266, %p267
      %p270 = scmp.ne.s32.totalorder %s255, %s269
      %p271 = scmp.eq.s32.totalorder %s41, 0
      %p272 = por %p270, %p271
      %s274 = sadd.s32 %s273, 1
      %p277 = scmp.eq.s32.totalorder %s35, 1
      %p278 = scmp.ne.s32.totalorder %s273, %s275
      %p279 = scmp.eq.s32.totalorder %s35, 0
      %p280 = por %p278, %p279
      %p281 = scmp.ne.s32.totalorder %s273, %s275
      %p282 = scmp.eq.s32.totalorder %s40, 1
      %p283 = por %p281, %p282
      %p284 = scmp.ne.s32.totalorder %s275, %s276
      %p285 = scmp.eq.s32.totalorder %s40, 0
      %p286 = por %p284, %p285
      %p287 = scmp.ne.s32.totalorder %s275, %s276
      %p288 = scmp.eq.s32.totalorder %s41, 1
      %p289 = por %p287, %p288
      %p291 = scmp.ne.s32.totalorder %s276, %s290
      %p292 = scmp.eq.s32.totalorder %s41, 0
      %p293 = por %p291, %p292
      %s295 = sadd.s32 %s294, 1
      %p298 = scmp.eq.s32.totalorder %s35, 1
      %p299 = scmp.ne.s32.totalorder %s294, %s296
      %p300 = scmp.eq.s32.totalorder %s35, 0
      %p301 = por %p299, %p300
      %p302 = scmp.ne.s32.totalorder %s294, %s296
      %p303 = scmp.eq.s32.totalorder %s40, 1
      %p304 = por %p302, %p303
      %p305 = scmp.ne.s32.totalorder %s296, %s297
      %p306 = scmp.eq.s32.totalorder %s40, 0
      %p307 = por %p305, %p306
      %p308 = scmp.ne.s32.totalorder %s296, %s297
      %p309 = scmp.eq.s32.totalorder %s41, 1
      %p310 = por %p308, %p309
      %p312 = scmp.ne.s32.totalorder %s297, %s311
      %p313 = scmp.eq.s32.totalorder %s41, 0
      %p314 = por %p312, %p313
      %s316 = sadd.s32 %s315, 1
      %p319 = scmp.eq.s32.totalorder %s35, 1
      %p320 = scmp.ne.s32.totalorder %s315, %s317
      %p321 = scmp.eq.s32.totalorder %s35, 0
      %p322 = por %p320, %p321
      %p323 = scmp.ne.s32.totalorder %s315, %s317
      %p324 = scmp.eq.s32.totalorder %s40, 1
      %p325 = por %p323, %p324
      %p326 = scmp.ne.s32.totalorder %s317, %s318
      %p327 = scmp.eq.s32.totalorder %s40, 0
      %p328 = por %p326, %p327
      %p329 = scmp.ne.s32.totalorder %s317, %s318
      %p330 = scmp.eq.s32.totalorder %s41, 1
      %p331 = por %p329, %p330
      %p333 = scmp.ne.s32.totalorder %s318, %s332
      %p334 = scmp.eq.s32.totalorder %s41, 0
      %p335 = por %p333, %p334
      %s336 = ssub.s32 %s35, %s42
      %p337 = scmp.eq.s32.totalorder %s336, 0
      %s339 = sadd.s32 %s338, 1
      %s340 = scalar_select %p337, %s338, %s339
      %p343 = pneg %p337
      %p344 = scmp.eq.s32.totalorder %s35, 1
      %p345 = por %p343, %p344
      %p346 = scmp.ne.s32.totalorder %s338, %s341
      %p347 = scmp.eq.s32.totalorder %s35, 0
      %p348 = por %p346, %p347
      %p349 = scmp.ne.s32.totalorder %s338, %s341
      %p350 = scmp.eq.s32.totalorder %s40, 1
      %p351 = por %p349, %p350
      %p352 = scmp.ne.s32.totalorder %s341, %s342
      %p353 = scmp.eq.s32.totalorder %s40, 0
      %p354 = por %p352, %p353
      %p355 = scmp.ne.s32.totalorder %s341, %s342
      %p356 = scmp.eq.s32.totalorder %s41, 1
      %p357 = por %p355, %p356
      %p359 = scmp.ne.s32.totalorder %s342, %s358
      %p360 = scmp.eq.s32.totalorder %s41, 0
      %p361 = por %p359, %p360
      %s362 = ssub.s32 %s35, %s42
      %p363 = scmp.eq.s32.totalorder %s362, 0
      %s365 = sadd.s32 %s364, 1
      %s366 = scalar_select %p363, %s364, %s365
      %p369 = pneg %p363
      %p370 = scmp.eq.s32.totalorder %s35, 1
      %p371 = por %p369, %p370
      %p372 = scmp.ne.s32.totalorder %s364, %s367
      %p373 = scmp.eq.s32.totalorder %s35, 0
      %p374 = por %p372, %p373
      %p375 = scmp.ne.s32.totalorder %s364, %s367
      %p376 = scmp.eq.s32.totalorder %s40, 1
      %p377 = por %p375, %p376
      %p378 = scmp.ne.s32.totalorder %s367, %s368
      %p379 = scmp.eq.s32.totalorder %s40, 0
      %p380 = por %p378, %p379
      %p381 = scmp.ne.s32.totalorder %s367, %s368
      %p382 = scmp.eq.s32.totalorder %s41, 1
      %p383 = por %p381, %p382
      %p385 = scmp.ne.s32.totalorder %s368, %s384
      %p386 = scmp.eq.s32.totalorder %s41, 0
      %p387 = por %p385, %p386
      %p388 = scmp.le.s32.totalorder 1, %s35
      %p389 = scmp.lt.s32.totalorder %s35, 3
      %p390 = pnand %p388, %p389
      %p391 = pneg %p390
      // Predicated region
      $region9: #{tpu_custom_call.1} parent=5 // pred_check
        _
      $region10: #{tpu_custom_call.1} parent=5 // pred_check_branch
        %393 = sbr.rel (%p390) target = $region12
      $region11: #{tpu_custom_call.1} parent=5 // pred_region
        %s394 = ssub.s32 %s35, 1
        // Predicated region
        $region13: #{tpu_custom_call.1} parent=11 // pred_check
          %p395 = pneg %p160
        $region14: #{tpu_custom_call.1} parent=11 // pred_check_branch
          %397 = sbr.rel (%p395) target = $region16
        $region15: #{tpu_custom_call.1} parent=11 // pred_region
          _
        $region16: #{tpu_custom_call.1} parent=11 // pred_fallthru
          _
        // Predicated region
        $region17: #{tpu_custom_call.1} parent=11 // pred_check
          %p398 = pneg %p181
        $region18: #{tpu_custom_call.1} parent=11 // pred_check_branch
          %400 = sbr.rel (%p398) target = $region20
        $region19: #{tpu_custom_call.1} parent=11 // pred_region
          %s402 = ssub.s32 16, 16
          %403 = vsyncadd [#allocation6], %s402
          %s405 = sshll.u32 [#allocation7], 4
          %s406 = int_to_ptr.vmem [resolvable:$true] %s405
          %408 = dma.hbm_to_vmem [thread:$0]  %s5, 16, %s406, [#allocation6]
        $region20: #{tpu_custom_call.1} parent=11 // pred_fallthru
          _
        // Predicated region
        $region21: #{tpu_custom_call.1} parent=11 // pred_check
          %p409 = pneg %p202
        $region22: #{tpu_custom_call.1} parent=11 // pred_check_branch
          %411 = sbr.rel (%p409) target = $region24
        $region23: #{tpu_custom_call.1} parent=11 // pred_region
          %s413 = ssub.s32 64, 64
          %414 = vsyncadd [#allocation9], %s413
          %s416 = sshll.u32 [#allocation8], 4
          %s417 = int_to_ptr.vmem [resolvable:$true] %s416
          %419 = dma.hbm_to_vmem [thread:$0]  %s6, 64, %s417, [#allocation9]
        $region24: #{tpu_custom_call.1} parent=11 // pred_fallthru
          _
        // Predicated region
        $region25: #{tpu_custom_call.1} parent=11 // pred_check
          %p420 = pneg %p223
        $region26: #{tpu_custom_call.1} parent=11 // pred_check_branch
          %422 = sbr.rel (%p420) target = $region28
        $region27: #{tpu_custom_call.1} parent=11 // pred_region
          %s424 = ssub.s32 16, 16
          %425 = vsyncadd [#allocation9], %s424
          %s427 = sshll.u32 [#allocation10], 4
          %s428 = int_to_ptr.vmem [resolvable:$true] %s427
          %430 = dma.hbm_to_vmem [thread:$0]  %s7, 16, %s428, [#allocation9]
        $region28: #{tpu_custom_call.1} parent=11 // pred_fallthru
          _
        // Predicated region
        $region29: #{tpu_custom_call.1} parent=11 // pred_check
          %p431 = pneg %p244
        $region30: #{tpu_custom_call.1} parent=11 // pred_check_branch
          %433 = sbr.rel (%p431) target = $region32
        $region31: #{tpu_custom_call.1} parent=11 // pred_region
          %s435 = ssub.s32 2048, 2048
          %436 = vsyncadd [#allocation12], %s435
          %s437 = sshll.u32 [#allocation11], 4
          %s438 = int_to_ptr.vmem [resolvable:$true] %s437
          %443 = dma.hbm_to_vmem [thread:$0]  %s8, 2048, %s438, [#allocation12], 128, 128, 8
        $region32: #{tpu_custom_call.1} parent=11 // pred_fallthru
          _
        // Predicated region
        $region33: #{tpu_custom_call.1} parent=11 // pred_check
          %p444 = pneg %p265
        $region34: #{tpu_custom_call.1} parent=11 // pred_check_branch
          %446 = sbr.rel (%p444) target = $region36
        $region35: #{tpu_custom_call.1} parent=11 // pred_region
          _
        $region36: #{tpu_custom_call.1} parent=11 // pred_fallthru
          _
        // Predicated region
        $region37: #{tpu_custom_call.1} parent=11 // pred_check
          %p447 = pneg %p286
        $region38: #{tpu_custom_call.1} parent=11 // pred_check_branch
          %449 = sbr.rel (%p447) target = $region40
        $region39: #{tpu_custom_call.1} parent=11 // pred_region
          _
        $region40: #{tpu_custom_call.1} parent=11 // pred_fallthru
          _
        // Predicated region
        $region41: #{tpu_custom_call.1} parent=11 // pred_check
          %p450 = pneg %p307
        $region42: #{tpu_custom_call.1} parent=11 // pred_check_branch
          %452 = sbr.rel (%p450) target = $region44
        $region43: #{tpu_custom_call.1} parent=11 // pred_region
          _
        $region44: #{tpu_custom_call.1} parent=11 // pred_fallthru
          _
        // Predicated region
        $region45: #{tpu_custom_call.1} parent=11 // pred_check
          %p453 = pneg %p328
        $region46: #{tpu_custom_call.1} parent=11 // pred_check_branch
          %455 = sbr.rel (%p453) target = $region48
        $region47: #{tpu_custom_call.1} parent=11 // pred_region
          _
        $region48: #{tpu_custom_call.1} parent=11 // pred_fallthru
          _
      $region12: #{tpu_custom_call.1} parent=5 // pred_fallthru
        _
      %p456 = scmp.lt.s32.totalorder %s35, 2
      // Predicated region
      $region49: #{tpu_custom_call.1} parent=5 // pred_check
        %p457 = pneg %p456
      $region50: #{tpu_custom_call.1} parent=5 // pred_check_branch
        %459 = sbr.rel (%p457) target = $region52
      $region51: #{tpu_custom_call.1} parent=5 // pred_region
        // Predicated region
        $region53: #{tpu_custom_call.1} parent=51 // pred_check
          %p460 = pneg %p55
        $region54: #{tpu_custom_call.1} parent=51 // pred_check_branch
          %462 = sbr.rel (%p460) target = $region56
        $region55: #{tpu_custom_call.1} parent=51 // pred_region
          %p463 = scmp.lt.s32.totalorder %s35, 1
          %s464 = scalar_select %p463, %s35, 1
          %s465 = smul.addr %s464, 8
          %s466 = scalar_lea.vmem %s0, %s465
        $region56: #{tpu_custom_call.1} parent=51 // pred_fallthru
          _
        // Predicated region
        $region57: #{tpu_custom_call.1} parent=51 // pred_check
          %p467 = pneg %p81
        $region58: #{tpu_custom_call.1} parent=51 // pred_check_branch
          %469 = sbr.rel (%p467) target = $region60
        $region59: #{tpu_custom_call.1} parent=51 // pred_region
          %p470 = scmp.lt.s32.totalorder %s35, 1
          %s471 = scalar_select %p470, %s35, 1
          %s472 = smul.addr %s471, 8
          %s473 = scalar_lea.vmem %s1, %s472
        $region60: #{tpu_custom_call.1} parent=51 // pred_fallthru
          _
        // Predicated region
        $region61: #{tpu_custom_call.1} parent=51 // pred_check
          %p474 = pneg %p107
        $region62: #{tpu_custom_call.1} parent=51 // pred_check_branch
          %476 = sbr.rel (%p474) target = $region64
        $region63: #{tpu_custom_call.1} parent=51 // pred_region
          %s477 = sand.u32 %s97, 1
          %s478 = scalar_lea.sflag [#allocation3], %s477
          %s479 = sand.u32 %s97, 1
          %s480 = smul.addr %s479, 8
          %s481 = scalar_lea.vmem [#allocation2], %s480
          %s483 = ssub.s32 128, 128
          %484 = vsyncadd %s478, %s483
          %s485 = smul.addr %s35, 128
          %s486 = scalar_lea.hbm %s2, %s485
          %s488 = sshll.u32 %s481, 4
          %s489 = int_to_ptr.vmem [resolvable:$true] %s488
          %491 = dma.hbm_to_vmem [thread:$0]  %s486, 128, %s489, %s478
        $region64: #{tpu_custom_call.1} parent=51 // pred_fallthru
          _
        // Predicated region
        $region65: #{tpu_custom_call.1} parent=51 // pred_check
          %p492 = pneg %p133
        $region66: #{tpu_custom_call.1} parent=51 // pred_check_branch
          %494 = sbr.rel (%p492) target = $region68
        $region67: #{tpu_custom_call.1} parent=51 // pred_region
          %s495 = sand.u32 %s35, 1
          %s496 = scalar_lea.sflag [#allocation6], %s495
          %s497 = sand.u32 %s123, 1
          %s498 = smul.addr %s497, 8
          %s499 = scalar_lea.vmem [#allocation5], %s498
          %s501 = ssub.s32 128, 128
          %502 = vsyncadd %s496, %s501
          %s503 = smul.addr %s35, 128
          %s504 = scalar_lea.hbm %s3, %s503
          %s506 = sshll.u32 %s499, 4
          %s507 = int_to_ptr.vmem [resolvable:$true] %s506
          %509 = dma.hbm_to_vmem [thread:$0]  %s504, 128, %s507, %s496
        $region68: #{tpu_custom_call.1} parent=51 // pred_fallthru
          _
      $region52: #{tpu_custom_call.1} parent=5 // pred_fallthru
        _
      %p510 = scmp.le.s32.totalorder 1, %s35
      %p511 = scmp.lt.s32.totalorder %s35, 3
      %p512 = pnand %p510, %p511
      %p513 = pneg %p512
      // Predicated region
      $region69: #{tpu_custom_call.1} parent=5 // pred_check
        _
      $region70: #{tpu_custom_call.1} parent=5 // pred_check_branch
        %515 = sbr.rel (%p512) target = $region72
      $region71: #{tpu_custom_call.1} parent=5 // pred_region
        %s516 = ssub.s32 %s35, 1
        %s517 = sand.u32 %s100, 1
        %s518 = scalar_lea.sflag [#allocation3], %s517
        %s519 = sand.u32 %s100, 1
        %s520 = smul.addr %s519, 8
        %s521 = scalar_lea.vmem [#allocation2], %s520
        // Predicated region
        $region73: #{tpu_custom_call.1} parent=71 // pred_check
          %p522 = pneg %p113
        $region74: #{tpu_custom_call.1} parent=71 // pred_check_branch
          %524 = sbr.rel (%p522) target = $region76
        $region75: #{tpu_custom_call.1} parent=71 // pred_region
          %525 = dma.done %s518, 128
        $region76: #{tpu_custom_call.1} parent=71 // pred_fallthru
          _
        %s526 = sand.u32 %s40, 1
        %s527 = scalar_lea.sflag [#allocation6], %s526
        %s528 = sand.u32 %s126, 1
        %s529 = smul.addr %s528, 8
        %s530 = scalar_lea.vmem [#allocation5], %s529
        // Predicated region
        $region77: #{tpu_custom_call.1} parent=71 // pred_check
          %p531 = pneg %p139
        $region78: #{tpu_custom_call.1} parent=71 // pred_check_branch
          %533 = sbr.rel (%p531) target = $region80
        $region79: #{tpu_custom_call.1} parent=71 // pred_region
          %534 = dma.done %s527, 128
        $region80: #{tpu_custom_call.1} parent=71 // pred_fallthru
          _
        // Predicated region
        $region81: #{tpu_custom_call.1} parent=71 // pred_check
          %p535 = pneg %p181
        $region82: #{tpu_custom_call.1} parent=71 // pred_check_branch
          %537 = sbr.rel (%p535) target = $region84
        $region83: #{tpu_custom_call.1} parent=71 // pred_region
          %538 = dma.done [#allocation6], 16
        $region84: #{tpu_custom_call.1} parent=71 // pred_fallthru
          _
        // Predicated region
        $region85: #{tpu_custom_call.1} parent=71 // pred_check
          %p539 = pneg %p202
        $region86: #{tpu_custom_call.1} parent=71 // pred_check_branch
          %541 = sbr.rel (%p539) target = $region88
        $region87: #{tpu_custom_call.1} parent=71 // pred_region
          %542 = dma.done [#allocation9], 64
        $region88: #{tpu_custom_call.1} parent=71 // pred_fallthru
          _
        // Predicated region
        $region89: #{tpu_custom_call.1} parent=71 // pred_check
          %p543 = pneg %p223
        $region90: #{tpu_custom_call.1} parent=71 // pred_check_branch
          %545 = sbr.rel (%p543) target = $region92
        $region91: #{tpu_custom_call.1} parent=71 // pred_region
          %546 = dma.done [#allocation9], 16
        $region92: #{tpu_custom_call.1} parent=71 // pred_fallthru
          _
        // Predicated region
        $region93: #{tpu_custom_call.1} parent=71 // pred_check
          %p547 = pneg %p244
        $region94: #{tpu_custom_call.1} parent=71 // pred_check_branch
          %549 = sbr.rel (%p547) target = $region96
        $region95: #{tpu_custom_call.1} parent=71 // pred_region
          %550 = dma.done [#allocation12], 2048
        $region96: #{tpu_custom_call.1} parent=71 // pred_fallthru
          _
        %p551 = scmp.lt.s32.totalorder %s40, 1
        %s552 = scalar_select %p551, %s40, 1
        %s553 = smul.addr %s552, 8
        %s554 = scalar_lea.vmem %s0, %s553
        %p555 = pneg %p61
        %p556 = pneg %p58
        %p557 = scmp.lt.s32.totalorder %s40, 1
        %s558 = scalar_select %p557, %s40, 1
        %s559 = smul.addr %s558, 8
        %s560 = scalar_lea.vmem %s1, %s559
        %p561 = pneg %p87
        %p562 = pneg %p84
        %s563 = sand.u32 %s100, 1
        %s564 = scalar_lea.sflag [#allocation3], %s563
        %s565 = sand.u32 %s100, 1
        %s566 = smul.addr %s565, 8
        %s567 = scalar_lea.vmem [#allocation2], %s566
        %p568 = pneg %p113
        %p569 = pneg %p110
        %s570 = sand.u32 %s40, 1
        %s571 = scalar_lea.sflag [#allocation6], %s570
        %s572 = sand.u32 %s126, 1
        %s573 = smul.addr %s572, 8
        %s574 = scalar_lea.vmem [#allocation5], %s573
        %p575 = pneg %p139
        %p576 = pneg %p136
        %p577 = pneg %p160
        %p578 = pneg %p157
        %p579 = pneg %p181
        %p580 = pneg %p178
        %p581 = pneg %p202
        %p582 = pneg %p199
        %p583 = pneg %p223
        %p584 = pneg %p220
        %p585 = pneg %p244
        %p586 = pneg %p241
        %p587 = pneg %p265
        %p588 = pneg %p262
        %p589 = pneg %p286
        %p590 = pneg %p283
        %p591 = pneg %p307
        %p592 = pneg %p304
        %p593 = pneg %p328
        %p594 = pneg %p325
        %p595 = pneg %p354
        %p596 = pneg %p351
        %s597 = sand.u32 %s341, 1
        %s598 = scalar_lea.sflag [#allocation4], %s597
        %s599 = sand.u32 %s341, 1
        %s600 = smul.addr %s599, 8
        %s601 = scalar_lea.vmem [#allocation13], %s600
        %p602 = pneg %p380
        %p603 = pneg %p377
        %s604 = sand.u32 %s367, 1
        %s605 = scalar_lea.sflag [#allocation15], %s604
        %s606 = sand.u32 %s367, 1
        %s607 = smul.addr %s606, 16
        %s608 = scalar_lea.vmem [#allocation14], %s607
        %p609 = scmp.lt.s32.totalorder %s40, 1
        %s610 = scalar_select %p609, %s40, 1
        %s611 = smul.addr %s610, 8
        %s612 = scalar_lea.vmem %s0, %s611
        %p613 = scmp.lt.s32.totalorder %s40, 1
        %s614 = scalar_select %p613, %s40, 1
        %s615 = smul.addr %s614, 8
        %s616 = scalar_lea.vmem %s1, %s615
        %v617 = vld [vmem:[%s612] sm:$0xff]
        %vm618 = vcmask 261120
        %v619 = vsel %vm618, %v617, 0.0
        %v620 = vrot.slane %v619, 4
        %v621 = vadd.f32 %v619, %v620
        %v622 = vrot.slane %v621, 2
        %v623 = vadd.f32 %v621, %v622
        %v624 = vrot.slane %v623, 1
        %v625 = vadd.f32 %v623, %v624
        %v626 = vrcp.pop 8.0
        %v627 = vmul.f32 %v625, %v626
        %v628 = vld [vmem:[%s4] sm:$0xff]
        %v629 = vld [vmem:[%s4 + $0x8] sm:$0xff]
        %v630 = vld [vmem:[%s4 + $0x10] sm:$0xff]
        %v631 = vld [vmem:[%s4 + $0x18] sm:$0xff]
        %v632 = vld [vmem:[#allocation7] sm:$0x1]
        %v634 = vsel %vm618, %v627, 0
        %636 = vmatprep.subr.mxu0 0.0
        %637 = vmatpush1.msra.mxu0 0.0
        %638 = vmatprep.subr.mxu0 0.0
        %639 = vmatpush1.msra.mxu0 0.0
        %640 = vmatprep.subr.mxu0 0.0
        %641 = vmatpush1.msra.mxu0 0.0
        %642 = vmatprep.subr.mxu0 0.0
        %643 = vmatpush1.msra.mxu0 0.0
        %644 = vmatprep.subr.mxu0 0.0
        %645 = vmatpush1.msra.mxu0 0.0
        %646 = vmatprep.subr.mxu0 0.0
        %647 = vmatpush1.msra.mxu0 0.0
        %648 = vmatprep.subr.mxu0 0.0
        %649 = vmatpush1.msra.mxu0 0.0
        %650 = vmatprep.subr.mxu0 0.0
        %651 = vmatpush1.msra.mxu0 0.0
        %652 = vmatprep.subr.mxu0 0.0
        %653 = vmatpush1.msra.mxu0 0.0
        %654 = vmatprep.subr.mxu0 0.0
        %655 = vmatpush1.msra.mxu0 0.0
        %656 = vmatprep.subr.mxu0 0.0
        %657 = vmatpush1.msra.mxu0 0.0
        %658 = vmatprep.subr.mxu0 0.0
        %659 = vmatpush1.msra.mxu0 0.0
        %660 = vmatprep.subr.mxu0 0.0
        %661 = vmatpush1.msra.mxu0 %v631
        %662 = vmatprep.subr.mxu0 0.0
        %663 = vmatpush1.msra.mxu0 %v630
        %664 = vmatprep.subr.mxu0 0.0
        %665 = vmatpush1.msra.mxu0 %v629
        %666 = vmatprep.subr.mxu0 0.0
        %667 = vmatpush1.msra.mxu0 %v628
        %668 = vmatprep.subr.mxu0 0.0
        %669 = vmatpush2.msra.mxu0 0.0
        %670 = vmatprep.subr.mxu0 0.0
        %671 = vmatpush2.msra.mxu0 0.0
        %672 = vmatprep.subr.mxu0 0.0
        %673 = vmatpush2.msra.mxu0 0.0
        %674 = vmatprep.subr.mxu0 0.0
        %675 = vmatpush2.msra.mxu0 0.0
        %676 = vmatprep.subr.mxu0 0.0
        %677 = vmatpush2.msra.mxu0 0.0
        %678 = vmatprep.subr.mxu0 0.0
        %679 = vmatpush2.msra.mxu0 0.0
        %680 = vmatprep.subr.mxu0 0.0
        %681 = vmatpush2.msra.mxu0 0.0
        %682 = vmatprep.subr.mxu0 0.0
        %683 = vmatpush2.msra.mxu0 0.0
        %684 = vmatprep.subr.mxu0 0.0
        %685 = vmatpush2.msra.mxu0 0.0
        %686 = vmatprep.subr.mxu0 0.0
        %687 = vmatpush2.msra.mxu0 0.0
        %688 = vmatprep.subr.mxu0 0.0
        %689 = vmatpush2.msra.mxu0 0.0
        %690 = vmatprep.subr.mxu0 0.0
        %691 = vmatpush2.msra.mxu0 0.0
        %692 = vmatprep.subr.mxu0 0.0
        %693 = vmatpush2.msra.mxu0 0.0
        %694 = vmatprep.subr.mxu0 0.0
        %695 = vmatpush2.msra.mxu0 0.0
        %696 = vmatprep.subr.mxu0 0.0
        %697 = vmatpush2.msra.mxu0 0.0
        %698 = vmatprep.subr.mxu0 0.0
        %699 = vmatpush2.msra.mxu0 0.0
        %700 = vmatprep.mubr.f32.mxu0 0.0
        %701 = vmatmul.mubr.f32.gmra.mxu0 %v634
        %v702 = vpop.f32.mrf.mxu0
        %v703 = vadd.f32 %v632, %v702
        %v704 = vpop.f32.mrf.mxu0
        %705 = vdwg.mxu0
        %v706 = vmax.f32 %v703, 0.0
        %v707 = vld [vmem:[#allocation8] sm:$0xf]
        %v708 = vld [vmem:[#allocation10] sm:$0x1]
        %vm709 = vcmask 31744
        %v711 = vsel %vm709, %v706, 0
        %vm713 = vcmask 1043456
        %v715 = vsel %vm713, %v707, 0
        %717 = vmatprep.subr.mxu0 0.0
        %718 = vmatpush1.msra.mxu0 0.0
        %719 = vmatprep.subr.mxu0 0.0
        %720 = vmatpush1.msra.mxu0 0.0
        %721 = vmatprep.subr.mxu0 0.0
        %722 = vmatpush1.msra.mxu0 0.0
        %723 = vmatprep.subr.mxu0 0.0
        %724 = vmatpush1.msra.mxu0 0.0
        %725 = vmatprep.subr.mxu0 0.0
        %726 = vmatpush1.msra.mxu0 0.0
        %727 = vmatprep.subr.mxu0 0.0
        %728 = vmatpush1.msra.mxu0 0.0
        %729 = vmatprep.subr.mxu0 0.0
        %730 = vmatpush1.msra.mxu0 0.0
        %731 = vmatprep.subr.mxu0 0.0
        %732 = vmatpush1.msra.mxu0 0.0
        %733 = vmatprep.subr.mxu0 0.0
        %734 = vmatpush1.msra.mxu0 0.0
        %735 = vmatprep.subr.mxu0 0.0
        %736 = vmatpush1.msra.mxu0 0.0
        %737 = vmatprep.subr.mxu0 0.0
        %738 = vmatpush1.msra.mxu0 0.0
        %739 = vmatprep.subr.mxu0 0.0
        %740 = vmatpush1.msra.mxu0 0.0
        %741 = vmatprep.subr.mxu0 0.0
        %742 = vmatpush1.msra.mxu0 0.0
        %743 = vmatprep.subr.mxu0 0.0
        %744 = vmatpush1.msra.mxu0 0.0
        %745 = vmatprep.subr.mxu0 0.0
        %746 = vmatpush1.msra.mxu0 0.0
        %747 = vmatprep.subr.mxu0 0.0
        %748 = vmatpush1.msra.mxu0 %v715
        %749 = vmatprep.subr.mxu0 0.0
        %750 = vmatpush2.msra.mxu0 0.0
        %751 = vmatprep.subr.mxu0 0.0
        %752 = vmatpush2.msra.mxu0 0.0
        %753 = vmatprep.subr.mxu0 0.0
        %754 = vmatpush2.msra.mxu0 0.0
        %755 = vmatprep.subr.mxu0 0.0
        %756 = vmatpush2.msra.mxu0 0.0
        %757 = vmatprep.subr.mxu0 0.0
        %758 = vmatpush2.msra.mxu0 0.0
        %759 = vmatprep.subr.mxu0 0.0
        %760 = vmatpush2.msra.mxu0 0.0
        %761 = vmatprep.subr.mxu0 0.0
        %762 = vmatpush2.msra.mxu0 0.0
        %763 = vmatprep.subr.mxu0 0.0
        %764 = vmatpush2.msra.mxu0 0.0
        %765 = vmatprep.subr.mxu0 0.0
        %766 = vmatpush2.msra.mxu0 0.0
        %767 = vmatprep.subr.mxu0 0.0
        %768 = vmatpush2.msra.mxu0 0.0
        %769 = vmatprep.subr.mxu0 0.0
        %770 = vmatpush2.msra.mxu0 0.0
        %771 = vmatprep.subr.mxu0 0.0
        %772 = vmatpush2.msra.mxu0 0.0
        %773 = vmatprep.subr.mxu0 0.0
        %774 = vmatpush2.msra.mxu0 0.0
        %775 = vmatprep.subr.mxu0 0.0
        %776 = vmatpush2.msra.mxu0 0.0
        %777 = vmatprep.subr.mxu0 0.0
        %778 = vmatpush2.msra.mxu0 0.0
        %779 = vmatprep.subr.mxu0 0.0
        %780 = vmatpush2.msra.mxu0 0.0
        %781 = vmatprep.mubr.f32.mxu0 0.0
        %782 = vmatmul.mubr.f32.gmra.mxu0 %v711
        %v783 = vpop.f32.mrf.mxu0
        %v784 = vadd.f32 %v708, %v783
        %v785 = vpop.f32.mrf.mxu0
        %786 = vdwg.mxu0
        %v787 = vxor.u32 %v784, 2147483648
        %v788 = vmul.f32 %v787, 1.442695
        %v789 = vpow.pop %v788
        %v790 = vadd.f32 %v789, 1.0
        %v791 = vrcp.pop %v790
        %v792 = vmul.f32 1.0, %v791
        %v793 = vld [vmem:[#allocation11] sm:$0xff]
        %v794 = vld [vmem:[#allocation11 + $0x8] sm:$0xff]
        %v795 = vld [vmem:[#allocation11 + $0x10] sm:$0xff]
        %v796 = vld [vmem:[#allocation11 + $0x18] sm:$0xff]
        %s798 = vtos %v792
        %v799 = vstv %s798
        %v801 = vmul.f32 %v799, %v793
        %v802 = vmul.f32 %v799, %v794
        %v803 = vmul.f32 %v799, %v795
        %v804 = vmul.f32 %v799, %v796
        %s805 = scalar_lea.vmem [#allocation11], 32
        %v806 = vld [vmem:[%s805] sm:$0xff]
        %v807 = vld [vmem:[%s805 + $0x8] sm:$0xff]
        %v808 = vld [vmem:[%s805 + $0x10] sm:$0xff]
        %v809 = vld [vmem:[%s805 + $0x18] sm:$0xff]
        %810 = vrot.lane.b32.xlu0 %v792, 127
        %v811 = vpop.permute.xlu0 %810
        %s812 = vtos %v811
        %v813 = vstv %s812
        %v815 = vmul.f32 %v813, %v806
        %v816 = vmul.f32 %v813, %v807
        %v817 = vmul.f32 %v813, %v808
        %v818 = vmul.f32 %v813, %v809
        %v819 = vadd.f32 %v801, %v815
        %v820 = vadd.f32 %v802, %v816
        %v821 = vadd.f32 %v803, %v817
        %v822 = vadd.f32 %v804, %v818
        %s823 = scalar_lea.vmem [#allocation11], 64
        %v824 = vld [vmem:[%s823] sm:$0xff]
        %v825 = vld [vmem:[%s823 + $0x8] sm:$0xff]
        %v826 = vld [vmem:[%s823 + $0x10] sm:$0xff]
        %v827 = vld [vmem:[%s823 + $0x18] sm:$0xff]
        %828 = vrot.lane.b32.xlu0 %v792, 126
        %v829 = vpop.permute.xlu0 %828
        %s830 = vtos %v829
        %v831 = vstv %s830
        %v833 = vmul.f32 %v831, %v824
        %v834 = vmul.f32 %v831, %v825
        %v835 = vmul.f32 %v831, %v826
        %v836 = vmul.f32 %v831, %v827
        %v837 = vadd.f32 %v819, %v833
        %v838 = vadd.f32 %v820, %v834
        %v839 = vadd.f32 %v821, %v835
        %v840 = vadd.f32 %v822, %v836
        %s841 = scalar_lea.vmem [#allocation11], 96
        %v842 = vld [vmem:[%s841] sm:$0xff]
        %v843 = vld [vmem:[%s841 + $0x8] sm:$0xff]
        %v844 = vld [vmem:[%s841 + $0x10] sm:$0xff]
        %v845 = vld [vmem:[%s841 + $0x18] sm:$0xff]
        %846 = vrot.lane.b32.xlu0 %v792, 125
        %v847 = vpop.permute.xlu0 %846
        %s848 = vtos %v847
        %v849 = vstv %s848
        %v851 = vmul.f32 %v849, %v842
        %v852 = vmul.f32 %v849, %v843
        %v853 = vmul.f32 %v849, %v844
        %v854 = vmul.f32 %v849, %v845
        %v855 = vadd.f32 %v837, %v851
        %v856 = vadd.f32 %v838, %v852
        %v857 = vadd.f32 %v839, %v853
        %v858 = vadd.f32 %v840, %v854
        %v859 = vld [vmem:[%s616] sm:$0xff]
        %v860 = vld [vmem:[%s521] sm:$0xff]
        %v861 = vld [vmem:[%s530] sm:$0xff]
        %v863 = vsel %vm618, %v859, 0
        %865 = vmatprep.subr.mxu0 0.0
        %866 = vmatpush1.msra.mxu0 0.0
        %867 = vmatprep.subr.mxu0 0.0
        %868 = vmatpush1.msra.mxu0 0.0
        %869 = vmatprep.subr.mxu0 0.0
        %870 = vmatpush1.msra.mxu0 0.0
        %871 = vmatprep.subr.mxu0 0.0
        %872 = vmatpush1.msra.mxu0 0.0
        %873 = vmatprep.subr.mxu0 0.0
        %874 = vmatpush1.msra.mxu0 0.0
        %875 = vmatprep.subr.mxu0 0.0
        %876 = vmatpush1.msra.mxu0 0.0
        %877 = vmatprep.subr.mxu0 0.0
        %878 = vmatpush1.msra.mxu0 0.0
        %879 = vmatprep.subr.mxu0 0.0
        %880 = vmatpush1.msra.mxu0 0.0
        %881 = vmatprep.subr.mxu0 0.0
        %882 = vmatpush1.msra.mxu0 0.0
        %883 = vmatprep.subr.mxu0 0.0
        %884 = vmatpush1.msra.mxu0 0.0
        %885 = vmatprep.subr.mxu0 0.0
        %886 = vmatpush1.msra.mxu0 0.0
        %887 = vmatprep.subr.mxu0 0.0
        %888 = vmatpush1.msra.mxu0 0.0
        %889 = vmatprep.subr.mxu0 0.0
        %890 = vmatpush1.msra.mxu0 %v858
        %891 = vmatprep.subr.mxu0 0.0
        %892 = vmatpush1.msra.mxu0 %v857
        %893 = vmatprep.subr.mxu0 0.0
        %894 = vmatpush1.msra.mxu0 %v856
        %895 = vmatprep.subr.mxu0 0.0
        %896 = vmatpush1.msra.mxu0 %v855
        %897 = vmatprep.subr.mxu0 0.0
        %898 = vmatpush2.msra.mxu0 0.0
        %899 = vmatprep.subr.mxu0 0.0
        %900 = vmatpush2.msra.mxu0 0.0
        %901 = vmatprep.subr.mxu0 0.0
        %902 = vmatpush2.msra.mxu0 0.0
        %903 = vmatprep.subr.mxu0 0.0
        %904 = vmatpush2.msra.mxu0 0.0
        %905 = vmatprep.subr.mxu0 0.0
        %906 = vmatpush2.msra.mxu0 0.0
        %907 = vmatprep.subr.mxu0 0.0
        %908 = vmatpush2.msra.mxu0 0.0
        %909 = vmatprep.subr.mxu0 0.0
        %910 = vmatpush2.msra.mxu0 0.0
        %911 = vmatprep.subr.mxu0 0.0
        %912 = vmatpush2.msra.mxu0 0.0
        %913 = vmatprep.subr.mxu0 0.0
        %914 = vmatpush2.msra.mxu0 0.0
        %915 = vmatprep.subr.mxu0 0.0
        %916 = vmatpush2.msra.mxu0 0.0
        %917 = vmatprep.subr.mxu0 0.0
        %918 = vmatpush2.msra.mxu0 0.0
        %919 = vmatprep.subr.mxu0 0.0
        %920 = vmatpush2.msra.mxu0 0.0
        %921 = vmatprep.subr.mxu0 0.0
        %922 = vmatpush2.msra.mxu0 0.0
        %923 = vmatprep.subr.mxu0 0.0
        %924 = vmatpush2.msra.mxu0 0.0
        %925 = vmatprep.subr.mxu0 0.0
        %926 = vmatpush2.msra.mxu0 0.0
        %927 = vmatprep.subr.mxu0 0.0
        %928 = vmatpush2.msra.mxu0 0.0
        %929 = vmatprep.mubr.f32.mxu0 0.0
        %930 = vmatmul.mubr.f32.gmra.mxu0 %v863
        %v931 = vpop.f32.mrf.mxu0
        %v932 = vadd.f32 0.0, %v931
        %v933 = vpop.f32.mrf.mxu0
        %934 = vdwg.mxu0
        %v935 = vmul.f32 %v932, 0.17677669
        %940 = vrot.lane.b32.xlu0 %v855, 112
        %v941 = vpop.permute.xlu0 %940
        %942 = vrot.lane.b32.xlu0 %v856, 112
        %v943 = vpop.permute.xlu0 %942
        %944 = vrot.lane.b32.xlu0 %v857, 112
        %v945 = vpop.permute.xlu0 %944
        %946 = vrot.lane.b32.xlu0 %v858, 112
        %v947 = vpop.permute.xlu0 %946
        %v953 = vsel %vm618, %v860, 0
        %955 = vmatprep.subr.mxu0 0.0
        %956 = vmatpush1.msra.mxu0 0.0
        %957 = vmatprep.subr.mxu0 0.0
        %958 = vmatpush1.msra.mxu0 0.0
        %959 = vmatprep.subr.mxu0 0.0
        %960 = vmatpush1.msra.mxu0 0.0
        %961 = vmatprep.subr.mxu0 0.0
        %962 = vmatpush1.msra.mxu0 0.0
        %963 = vmatprep.subr.mxu0 0.0
        %964 = vmatpush1.msra.mxu0 0.0
        %965 = vmatprep.subr.mxu0 0.0
        %966 = vmatpush1.msra.mxu0 0.0
        %967 = vmatprep.subr.mxu0 0.0
        %968 = vmatpush1.msra.mxu0 0.0
        %969 = vmatprep.subr.mxu0 0.0
        %970 = vmatpush1.msra.mxu0 0.0
        %971 = vmatprep.subr.mxu0 0.0
        %972 = vmatpush1.msra.mxu0 0.0
        %973 = vmatprep.subr.mxu0 0.0
        %974 = vmatpush1.msra.mxu0 0.0
        %975 = vmatprep.subr.mxu0 0.0
        %976 = vmatpush1.msra.mxu0 0.0
        %977 = vmatprep.subr.mxu0 0.0
        %978 = vmatpush1.msra.mxu0 0.0
        %979 = vmatprep.subr.mxu0 0.0
        %980 = vmatpush1.msra.mxu0 %v947
        %981 = vmatprep.subr.mxu0 0.0
        %982 = vmatpush1.msra.mxu0 %v945
        %983 = vmatprep.subr.mxu0 0.0
        %984 = vmatpush1.msra.mxu0 %v943
        %985 = vmatprep.subr.mxu0 0.0
        %986 = vmatpush1.msra.mxu0 %v941
        %987 = vmatprep.subr.mxu0 0.0
        %988 = vmatpush2.msra.mxu0 0.0
        %989 = vmatprep.subr.mxu0 0.0
        %990 = vmatpush2.msra.mxu0 0.0
        %991 = vmatprep.subr.mxu0 0.0
        %992 = vmatpush2.msra.mxu0 0.0
        %993 = vmatprep.subr.mxu0 0.0
        %994 = vmatpush2.msra.mxu0 0.0
        %995 = vmatprep.subr.mxu0 0.0
        %996 = vmatpush2.msra.mxu0 0.0
        %997 = vmatprep.subr.mxu0 0.0
        %998 = vmatpush2.msra.mxu0 0.0
        %999 = vmatprep.subr.mxu0 0.0
        %1000 = vmatpush2.msra.mxu0 0.0
        %1001 = vmatprep.subr.mxu0 0.0
        %1002 = vmatpush2.msra.mxu0 0.0
        %1003 = vmatprep.subr.mxu0 0.0
        %1004 = vmatpush2.msra.mxu0 0.0
        %1005 = vmatprep.subr.mxu0 0.0
        %1006 = vmatpush2.msra.mxu0 0.0
        %1007 = vmatprep.subr.mxu0 0.0
        %1008 = vmatpush2.msra.mxu0 0.0
        %1009 = vmatprep.subr.mxu0 0.0
        %1010 = vmatpush2.msra.mxu0 0.0
        %1011 = vmatprep.subr.mxu0 0.0
        %1012 = vmatpush2.msra.mxu0 0.0
        %1013 = vmatprep.subr.mxu0 0.0
        %1014 = vmatpush2.msra.mxu0 0.0
        %1015 = vmatprep.subr.mxu0 0.0
        %1016 = vmatpush2.msra.mxu0 0.0
        %1017 = vmatprep.subr.mxu0 0.0
        %1018 = vmatpush2.msra.mxu0 0.0
        %1019 = vmatprep.mubr.f32.mxu0 0.0
        %1020 = vmatmul.mubr.f32.gmra.mxu0 %v953
        %v1021 = vpop.f32.mrf.mxu0
        %v1022 = vadd.f32 0.0, %v1021
        %v1023 = vpop.f32.mrf.mxu0
        %1024 = vdwg.mxu0
        %1025 = vrot.lane.b32.xlu0 %v855, 96
        %v1026 = vpop.permute.xlu0 %1025
        %1027 = vrot.lane.b32.xlu0 %v856, 96
        %v1028 = vpop.permute.xlu0 %1027
        %1029 = vrot.lane.b32.xlu0 %v857, 96
        %v1030 = vpop.permute.xlu0 %1029
        %1031 = vrot.lane.b32.xlu0 %v858, 96
        %v1032 = vpop.permute.xlu0 %1031
        %v1038 = vsel %vm618, %v861, 0
        %1040 = vmatprep.subr.mxu0 0.0
        %1041 = vmatpush1.msra.mxu0 0.0
        %1042 = vmatprep.subr.mxu0 0.0
        %1043 = vmatpush1.msra.mxu0 0.0
        %1044 = vmatprep.subr.mxu0 0.0
        %1045 = vmatpush1.msra.mxu0 0.0
        %1046 = vmatprep.subr.mxu0 0.0
        %1047 = vmatpush1.msra.mxu0 0.0
        %1048 = vmatprep.subr.mxu0 0.0
        %1049 = vmatpush1.msra.mxu0 0.0
        %1050 = vmatprep.subr.mxu0 0.0
        %1051 = vmatpush1.msra.mxu0 0.0
        %1052 = vmatprep.subr.mxu0 0.0
        %1053 = vmatpush1.msra.mxu0 0.0
        %1054 = vmatprep.subr.mxu0 0.0
        %1055 = vmatpush1.msra.mxu0 0.0
        %1056 = vmatprep.subr.mxu0 0.0
        %1057 = vmatpush1.msra.mxu0 0.0
        %1058 = vmatprep.subr.mxu0 0.0
        %1059 = vmatpush1.msra.mxu0 0.0
        %1060 = vmatprep.subr.mxu0 0.0
        %1061 = vmatpush1.msra.mxu0 0.0
        %1062 = vmatprep.subr.mxu0 0.0
        %1063 = vmatpush1.msra.mxu0 0.0
        %1064 = vmatprep.subr.mxu0 0.0
        %1065 = vmatpush1.msra.mxu0 %v1032
        %1066 = vmatprep.subr.mxu0 0.0
        %1067 = vmatpush1.msra.mxu0 %v1030
        %1068 = vmatprep.subr.mxu0 0.0
        %1069 = vmatpush1.msra.mxu0 %v1028
        %1070 = vmatprep.subr.mxu0 0.0
        %1071 = vmatpush1.msra.mxu0 %v1026
        %1072 = vmatprep.subr.mxu0 0.0
        %1073 = vmatpush2.msra.mxu0 0.0
        %1074 = vmatprep.subr.mxu0 0.0
        %1075 = vmatpush2.msra.mxu0 0.0
        %1076 = vmatprep.subr.mxu0 0.0
        %1077 = vmatpush2.msra.mxu0 0.0
        %1078 = vmatprep.subr.mxu0 0.0
        %1079 = vmatpush2.msra.mxu0 0.0
        %1080 = vmatprep.subr.mxu0 0.0
        %1081 = vmatpush2.msra.mxu0 0.0
        %1082 = vmatprep.subr.mxu0 0.0
        %1083 = vmatpush2.msra.mxu0 0.0
        %1084 = vmatprep.subr.mxu0 0.0
        %1085 = vmatpush2.msra.mxu0 0.0
        %1086 = vmatprep.subr.mxu0 0.0
        %1087 = vmatpush2.msra.mxu0 0.0
        %1088 = vmatprep.subr.mxu0 0.0
        %1089 = vmatpush2.msra.mxu0 0.0
        %1090 = vmatprep.subr.mxu0 0.0
        %1091 = vmatpush2.msra.mxu0 0.0
        %1092 = vmatprep.subr.mxu0 0.0
        %1093 = vmatpush2.msra.mxu0 0.0
        %1094 = vmatprep.subr.mxu0 0.0
        %1095 = vmatpush2.msra.mxu0 0.0
        %1096 = vmatprep.subr.mxu0 0.0
        %1097 = vmatpush2.msra.mxu0 0.0
        %1098 = vmatprep.subr.mxu0 0.0
        %1099 = vmatpush2.msra.mxu0 0.0
        %1100 = vmatprep.subr.mxu0 0.0
        %1101 = vmatpush2.msra.mxu0 0.0
        %1102 = vmatprep.subr.mxu0 0.0
        %1103 = vmatpush2.msra.mxu0 0.0
        %1104 = vmatprep.mubr.f32.mxu0 0.0
        %1105 = vmatmul.mubr.f32.gmra.mxu0 %v1038
        %v1106 = vpop.f32.mrf.mxu0
        %v1107 = vadd.f32 0.0, %v1106
        %v1108 = vpop.f32.mrf.mxu0
        %1109 = vdwg.mxu0
        %v1110 = vld [vmem:[%s10] sm:$0x1]
        %v1112 = vlaneseq
        %v1113 = vshrl.u32 %v1112, 7
        %v1114 = vsub.s32 0, %v1113
        %v1115 = vrot.slane %v1110, %v1114
        %v1117 = vadd.f32 %v859, %v1115
        %vm1118 = vcmask 64512
        %v1120 = vsel %vm1118, %v935, 0
        %v1123 = vsel %vm1118, %v1022, 0
        %1125 = vmatprep.subr.mxu0 0.0
        %1126 = vmatpush1.xpose.msra.mxu0 0.0
        %1127 = vmatprep.subr.mxu0 0.0
        %1128 = vmatpush1.xpose.msra.mxu0 0.0
        %1129 = vmatprep.subr.mxu0 0.0
        %1130 = vmatpush1.xpose.msra.mxu0 0.0
        %1131 = vmatprep.subr.mxu0 0.0
        %1132 = vmatpush1.xpose.msra.mxu0 0.0
        %1133 = vmatprep.subr.mxu0 0.0
        %1134 = vmatpush1.xpose.msra.mxu0 0.0
        %1135 = vmatprep.subr.mxu0 0.0
        %1136 = vmatpush1.xpose.msra.mxu0 0.0
        %1137 = vmatprep.subr.mxu0 0.0
        %1138 = vmatpush1.xpose.msra.mxu0 0.0
        %1139 = vmatprep.subr.mxu0 0.0
        %1140 = vmatpush1.xpose.msra.mxu0 0.0
        %1141 = vmatprep.subr.mxu0 0.0
        %1142 = vmatpush1.xpose.msra.mxu0 0.0
        %1143 = vmatprep.subr.mxu0 0.0
        %1144 = vmatpush1.xpose.msra.mxu0 0.0
        %1145 = vmatprep.subr.mxu0 0.0
        %1146 = vmatpush1.xpose.msra.mxu0 0.0
        %1147 = vmatprep.subr.mxu0 0.0
        %1148 = vmatpush1.xpose.msra.mxu0 0.0
        %1149 = vmatprep.subr.mxu0 0.0
        %1150 = vmatpush1.xpose.msra.mxu0 0.0
        %1151 = vmatprep.subr.mxu0 0.0
        %1152 = vmatpush1.xpose.msra.mxu0 0.0
        %1153 = vmatprep.subr.mxu0 0.0
        %1154 = vmatpush1.xpose.msra.mxu0 0.0
        %1155 = vmatprep.subr.mxu0 0.0
        %1156 = vmatpush1.xpose.msra.mxu0 %v1123
        %1157 = vmatprep.subr.mxu0 0.0
        %1158 = vmatpush2.xpose.msra.mxu0 0.0
        %1159 = vmatprep.subr.mxu0 0.0
        %1160 = vmatpush2.xpose.msra.mxu0 0.0
        %1161 = vmatprep.subr.mxu0 0.0
        %1162 = vmatpush2.xpose.msra.mxu0 0.0
        %1163 = vmatprep.subr.mxu0 0.0
        %1164 = vmatpush2.xpose.msra.mxu0 0.0
        %1165 = vmatprep.subr.mxu0 0.0
        %1166 = vmatpush2.xpose.msra.mxu0 0.0
        %1167 = vmatprep.subr.mxu0 0.0
        %1168 = vmatpush2.xpose.msra.mxu0 0.0
        %1169 = vmatprep.subr.mxu0 0.0
        %1170 = vmatpush2.xpose.msra.mxu0 0.0
        %1171 = vmatprep.subr.mxu0 0.0
        %1172 = vmatpush2.xpose.msra.mxu0 0.0
        %1173 = vmatprep.subr.mxu0 0.0
        %1174 = vmatpush2.xpose.msra.mxu0 0.0
        %1175 = vmatprep.subr.mxu0 0.0
        %1176 = vmatpush2.xpose.msra.mxu0 0.0
        %1177 = vmatprep.subr.mxu0 0.0
        %1178 = vmatpush2.xpose.msra.mxu0 0.0
        %1179 = vmatprep.subr.mxu0 0.0
        %1180 = vmatpush2.xpose.msra.mxu0 0.0
        %1181 = vmatprep.subr.mxu0 0.0
        %1182 = vmatpush2.xpose.msra.mxu0 0.0
        %1183 = vmatprep.subr.mxu0 0.0
        %1184 = vmatpush2.xpose.msra.mxu0 0.0
        %1185 = vmatprep.subr.mxu0 0.0
        %1186 = vmatpush2.xpose.msra.mxu0 0.0
        %1187 = vmatprep.subr.mxu0 0.0
        %1188 = vmatpush2.xpose.msra.mxu0 0.0
        %1189 = vmatprep.mubr.f32.mxu0 0.0
        %1190 = vmatmul.mubr.f32.gmra.mxu0 %v1120
        %v1191 = vpop.f32.mrf.mxu0
        %v1192 = vadd.f32 0.0, %v1191
        %v1193 = vpop.f32.mrf.mxu0
        %1194 = vdwg.mxu0
        %v1195 = vsel %vm1118, %v1192, -inf
        %1196 = vmax.xlane.f32.xlu0 %v1195
        %v1197 = vpop.xlane.xlu0 %1196
        %v1198 = vsub.f32 %v1192, %v1197
        %v1199 = vmul.f32 %v1198, 1.442695
        %v1200 = vpow.pop %v1199
        %v1201 = vsel %vm1118, %v1200, 0.0
        %1202 = vadd.xlane.f32.xlu0 %v1201
        %v1203 = vpop.xlane.xlu0 %1202
        %v1204 = vrcp.pop %v1203
        %v1205 = vmul.f32 %v1200, %v1204
        %1206 = vst.msk [vmem:[%s608] sm:$0xff] %vm1118, %v1205
        %v1208 = vsel %vm1118, %v1205, 0
        %1210 = vmatprep.subr.mxu0 0.0
        %1211 = vmatpush1.msra.mxu0 0.0
        %1212 = vmatprep.subr.mxu0 0.0
        %1213 = vmatpush1.msra.mxu0 0.0
        %1214 = vmatprep.subr.mxu0 0.0
        %1215 = vmatpush1.msra.mxu0 0.0
        %1216 = vmatprep.subr.mxu0 0.0
        %1217 = vmatpush1.msra.mxu0 0.0
        %1218 = vmatprep.subr.mxu0 0.0
        %1219 = vmatpush1.msra.mxu0 0.0
        %1220 = vmatprep.subr.mxu0 0.0
        %1221 = vmatpush1.msra.mxu0 0.0
        %1222 = vmatprep.subr.mxu0 0.0
        %1223 = vmatpush1.msra.mxu0 0.0
        %1224 = vmatprep.subr.mxu0 0.0
        %1225 = vmatpush1.msra.mxu0 0.0
        %1226 = vmatprep.subr.mxu0 0.0
        %1227 = vmatpush1.msra.mxu0 0.0
        %1228 = vmatprep.subr.mxu0 0.0
        %1229 = vmatpush1.msra.mxu0 0.0
        %1230 = vmatprep.subr.mxu0 0.0
        %1231 = vmatpush1.msra.mxu0 0.0
        %1232 = vmatprep.subr.mxu0 0.0
        %1233 = vmatpush1.msra.mxu0 0.0
        %1234 = vmatprep.subr.mxu0 0.0
        %1235 = vmatpush1.msra.mxu0 0.0
        %1236 = vmatprep.subr.mxu0 0.0
        %1237 = vmatpush1.msra.mxu0 0.0
        %1238 = vmatprep.subr.mxu0 0.0
        %1239 = vmatpush1.msra.mxu0 0.0
        %1240 = vmatprep.subr.mxu0 0.0
        %1241 = vmatpush1.msra.mxu0 %v1107
        %1242 = vmatprep.subr.mxu0 0.0
        %1243 = vmatpush2.msra.mxu0 0.0
        %1244 = vmatprep.subr.mxu0 0.0
        %1245 = vmatpush2.msra.mxu0 0.0
        %1246 = vmatprep.subr.mxu0 0.0
        %1247 = vmatpush2.msra.mxu0 0.0
        %1248 = vmatprep.subr.mxu0 0.0
        %1249 = vmatpush2.msra.mxu0 0.0
        %1250 = vmatprep.subr.mxu0 0.0
        %1251 = vmatpush2.msra.mxu0 0.0
        %1252 = vmatprep.subr.mxu0 0.0
        %1253 = vmatpush2.msra.mxu0 0.0
        %1254 = vmatprep.subr.mxu0 0.0
        %1255 = vmatpush2.msra.mxu0 0.0
        %1256 = vmatprep.subr.mxu0 0.0
        %1257 = vmatpush2.msra.mxu0 0.0
        %1258 = vmatprep.subr.mxu0 0.0
        %1259 = vmatpush2.msra.mxu0 0.0
        %1260 = vmatprep.subr.mxu0 0.0
        %1261 = vmatpush2.msra.mxu0 0.0
        %1262 = vmatprep.subr.mxu0 0.0
        %1263 = vmatpush2.msra.mxu0 0.0
        %1264 = vmatprep.subr.mxu0 0.0
        %1265 = vmatpush2.msra.mxu0 0.0
        %1266 = vmatprep.subr.mxu0 0.0
        %1267 = vmatpush2.msra.mxu0 0.0
        %1268 = vmatprep.subr.mxu0 0.0
        %1269 = vmatpush2.msra.mxu0 0.0
        %1270 = vmatprep.subr.mxu0 0.0
        %1271 = vmatpush2.msra.mxu0 0.0
        %1272 = vmatprep.subr.mxu0 0.0
        %1273 = vmatpush2.msra.mxu0 0.0
        %1274 = vmatprep.mubr.f32.mxu0 0.0
        %1275 = vmatmul.mubr.f32.gmra.mxu0 %v1208
        %v1276 = vpop.f32.mrf.mxu0
        %v1277 = vadd.f32 0.0, %v1276
        %v1278 = vpop.f32.mrf.mxu0
        %1279 = vdwg.mxu0
        %v1280 = vld [vmem:[%s9] sm:$0xff]
        %v1282 = vsel %vm1118, %v1277, 0
        %1284 = vmatprep.subr.mxu0 0.0
        %1285 = vmatpush1.msra.mxu0 0.0
        %1286 = vmatprep.subr.mxu0 0.0
        %1287 = vmatpush1.msra.mxu0 0.0
        %1288 = vmatprep.subr.mxu0 0.0
        %1289 = vmatpush1.msra.mxu0 0.0
        %1290 = vmatprep.subr.mxu0 0.0
        %1291 = vmatpush1.msra.mxu0 0.0
        %1292 = vmatprep.subr.mxu0 0.0
        %1293 = vmatpush1.msra.mxu0 0.0
        %1294 = vmatprep.subr.mxu0 0.0
        %1295 = vmatpush1.msra.mxu0 0.0
        %1296 = vmatprep.subr.mxu0 0.0
        %1297 = vmatpush1.msra.mxu0 0.0
        %1298 = vmatprep.subr.mxu0 0.0
        %1299 = vmatpush1.msra.mxu0 0.0
        %1300 = vmatprep.subr.mxu0 0.0
        %1301 = vmatpush1.msra.mxu0 0.0
        %1302 = vmatprep.subr.mxu0 0.0
        %1303 = vmatpush1.msra.mxu0 0.0
        %1304 = vmatprep.subr.mxu0 0.0
        %1305 = vmatpush1.msra.mxu0 0.0
        %1306 = vmatprep.subr.mxu0 0.0
        %1307 = vmatpush1.msra.mxu0 0.0
        %1308 = vmatprep.subr.mxu0 0.0
        %1309 = vmatpush1.msra.mxu0 0.0
        %1310 = vmatprep.subr.mxu0 0.0
        %1311 = vmatpush1.msra.mxu0 0.0
        %1312 = vmatprep.subr.mxu0 0.0
        %1313 = vmatpush1.msra.mxu0 0.0
        %1314 = vmatprep.subr.mxu0 0.0
        %1315 = vmatpush1.msra.mxu0 %v1280
        %1316 = vmatprep.subr.mxu0 0.0
        %1317 = vmatpush2.msra.mxu0 0.0
        %1318 = vmatprep.subr.mxu0 0.0
        %1319 = vmatpush2.msra.mxu0 0.0
        %1320 = vmatprep.subr.mxu0 0.0
        %1321 = vmatpush2.msra.mxu0 0.0
        %1322 = vmatprep.subr.mxu0 0.0
        %1323 = vmatpush2.msra.mxu0 0.0
        %1324 = vmatprep.subr.mxu0 0.0
        %1325 = vmatpush2.msra.mxu0 0.0
        %1326 = vmatprep.subr.mxu0 0.0
        %1327 = vmatpush2.msra.mxu0 0.0
        %1328 = vmatprep.subr.mxu0 0.0
        %1329 = vmatpush2.msra.mxu0 0.0
        %1330 = vmatprep.subr.mxu0 0.0
        %1331 = vmatpush2.msra.mxu0 0.0
        %1332 = vmatprep.subr.mxu0 0.0
        %1333 = vmatpush2.msra.mxu0 0.0
        %1334 = vmatprep.subr.mxu0 0.0
        %1335 = vmatpush2.msra.mxu0 0.0
        %1336 = vmatprep.subr.mxu0 0.0
        %1337 = vmatpush2.msra.mxu0 0.0
        %1338 = vmatprep.subr.mxu0 0.0
        %1339 = vmatpush2.msra.mxu0 0.0
        %1340 = vmatprep.subr.mxu0 0.0
        %1341 = vmatpush2.msra.mxu0 0.0
        %1342 = vmatprep.subr.mxu0 0.0
        %1343 = vmatpush2.msra.mxu0 0.0
        %1344 = vmatprep.subr.mxu0 0.0
        %1345 = vmatpush2.msra.mxu0 0.0
        %1346 = vmatprep.subr.mxu0 0.0
        %1347 = vmatpush2.msra.mxu0 0.0
        %1348 = vmatprep.mubr.f32.mxu0 0.0
        %1349 = vmatmul.mubr.f32.gmra.mxu0 %v1282
        %v1350 = vpop.f32.mrf.mxu0
        %v1351 = vadd.f32 0.0, %v1350
        %v1352 = vpop.f32.mrf.mxu0
        %1353 = vdwg.mxu0
        %v1354 = vadd.f32 %v1117, %v1351
        %1355 = vrot.lane.b32.xlu0 %v935, 120
        %v1356 = vpop.permute.xlu0 %1355
        %1357 = vrot.lane.b32.xlu0 %v1022, 120
        %v1358 = vpop.permute.xlu0 %1357
        %v1359 = vsel %vm1118, %v1356, 0
        %v1361 = vsel %vm1118, %v1358, 0
        %1363 = vmatprep.subr.mxu0 0.0
        %1364 = vmatpush1.xpose.msra.mxu0 0.0
        %1365 = vmatprep.subr.mxu0 0.0
        %1366 = vmatpush1.xpose.msra.mxu0 0.0
        %1367 = vmatprep.subr.mxu0 0.0
        %1368 = vmatpush1.xpose.msra.mxu0 0.0
        %1369 = vmatprep.subr.mxu0 0.0
        %1370 = vmatpush1.xpose.msra.mxu0 0.0
        %1371 = vmatprep.subr.mxu0 0.0
        %1372 = vmatpush1.xpose.msra.mxu0 0.0
        %1373 = vmatprep.subr.mxu0 0.0
        %1374 = vmatpush1.xpose.msra.mxu0 0.0
        %1375 = vmatprep.subr.mxu0 0.0
        %1376 = vmatpush1.xpose.msra.mxu0 0.0
        %1377 = vmatprep.subr.mxu0 0.0
        %1378 = vmatpush1.xpose.msra.mxu0 0.0
        %1379 = vmatprep.subr.mxu0 0.0
        %1380 = vmatpush1.xpose.msra.mxu0 0.0
        %1381 = vmatprep.subr.mxu0 0.0
        %1382 = vmatpush1.xpose.msra.mxu0 0.0
        %1383 = vmatprep.subr.mxu0 0.0
        %1384 = vmatpush1.xpose.msra.mxu0 0.0
        %1385 = vmatprep.subr.mxu0 0.0
        %1386 = vmatpush1.xpose.msra.mxu0 0.0
        %1387 = vmatprep.subr.mxu0 0.0
        %1388 = vmatpush1.xpose.msra.mxu0 0.0
        %1389 = vmatprep.subr.mxu0 0.0
        %1390 = vmatpush1.xpose.msra.mxu0 0.0
        %1391 = vmatprep.subr.mxu0 0.0
        %1392 = vmatpush1.xpose.msra.mxu0 0.0
        %1393 = vmatprep.subr.mxu0 0.0
        %1394 = vmatpush1.xpose.msra.mxu0 %v1361
        %1395 = vmatprep.subr.mxu0 0.0
        %1396 = vmatpush2.xpose.msra.mxu0 0.0
        %1397 = vmatprep.subr.mxu0 0.0
        %1398 = vmatpush2.xpose.msra.mxu0 0.0
        %1399 = vmatprep.subr.mxu0 0.0
        %1400 = vmatpush2.xpose.msra.mxu0 0.0
        %1401 = vmatprep.subr.mxu0 0.0
        %1402 = vmatpush2.xpose.msra.mxu0 0.0
        %1403 = vmatprep.subr.mxu0 0.0
        %1404 = vmatpush2.xpose.msra.mxu0 0.0
        %1405 = vmatprep.subr.mxu0 0.0
        %1406 = vmatpush2.xpose.msra.mxu0 0.0
        %1407 = vmatprep.subr.mxu0 0.0
        %1408 = vmatpush2.xpose.msra.mxu0 0.0
        %1409 = vmatprep.subr.mxu0 0.0
        %1410 = vmatpush2.xpose.msra.mxu0 0.0
        %1411 = vmatprep.subr.mxu0 0.0
        %1412 = vmatpush2.xpose.msra.mxu0 0.0
        %1413 = vmatprep.subr.mxu0 0.0
        %1414 = vmatpush2.xpose.msra.mxu0 0.0
        %1415 = vmatprep.subr.mxu0 0.0
        %1416 = vmatpush2.xpose.msra.mxu0 0.0
        %1417 = vmatprep.subr.mxu0 0.0
        %1418 = vmatpush2.xpose.msra.mxu0 0.0
        %1419 = vmatprep.subr.mxu0 0.0
        %1420 = vmatpush2.xpose.msra.mxu0 0.0
        %1421 = vmatprep.subr.mxu0 0.0
        %1422 = vmatpush2.xpose.msra.mxu0 0.0
        %1423 = vmatprep.subr.mxu0 0.0
        %1424 = vmatpush2.xpose.msra.mxu0 0.0
        %1425 = vmatprep.subr.mxu0 0.0
        %1426 = vmatpush2.xpose.msra.mxu0 0.0
        %1427 = vmatprep.mubr.f32.mxu0 0.0
        %1428 = vmatmul.mubr.f32.gmra.mxu0 %v1359
        %v1429 = vpop.f32.mrf.mxu0
        %v1430 = vadd.f32 0.0, %v1429
        %v1431 = vpop.f32.mrf.mxu0
        %1432 = vdwg.mxu0
        %v1433 = vsel %vm1118, %v1430, -inf
        %1434 = vmax.xlane.f32.xlu0 %v1433
        %v1435 = vpop.xlane.xlu0 %1434
        %v1436 = vsub.f32 %v1430, %v1435
        %v1437 = vmul.f32 %v1436, 1.442695
        %v1438 = vpow.pop %v1437
        %v1439 = vsel %vm1118, %v1438, 0.0
        %1440 = vadd.xlane.f32.xlu0 %v1439
        %v1441 = vpop.xlane.xlu0 %1440
        %v1442 = vrcp.pop %v1441
        %v1443 = vmul.f32 %v1438, %v1442
        %s1444 = scalar_lea.vmem %s608, 8 [#allocation14]
        %1445 = vst.msk [vmem:[%s1444] sm:$0xff] %vm1118, %v1443
        %1447 = vrot.lane.b32.xlu0 %v1107, 120
        %v1448 = vpop.permute.xlu0 %1447
        %v1451 = vsel %vm1118, %v1443, 0
        %1453 = vmatprep.subr.mxu0 0.0
        %1454 = vmatpush1.msra.mxu0 0.0
        %1455 = vmatprep.subr.mxu0 0.0
        %1456 = vmatpush1.msra.mxu0 0.0
        %1457 = vmatprep.subr.mxu0 0.0
        %1458 = vmatpush1.msra.mxu0 0.0
        %1459 = vmatprep.subr.mxu0 0.0
        %1460 = vmatpush1.msra.mxu0 0.0
        %1461 = vmatprep.subr.mxu0 0.0
        %1462 = vmatpush1.msra.mxu0 0.0
        %1463 = vmatprep.subr.mxu0 0.0
        %1464 = vmatpush1.msra.mxu0 0.0
        %1465 = vmatprep.subr.mxu0 0.0
        %1466 = vmatpush1.msra.mxu0 0.0
        %1467 = vmatprep.subr.mxu0 0.0
        %1468 = vmatpush1.msra.mxu0 0.0
        %1469 = vmatprep.subr.mxu0 0.0
        %1470 = vmatpush1.msra.mxu0 0.0
        %1471 = vmatprep.subr.mxu0 0.0
        %1472 = vmatpush1.msra.mxu0 0.0
        %1473 = vmatprep.subr.mxu0 0.0
        %1474 = vmatpush1.msra.mxu0 0.0
        %1475 = vmatprep.subr.mxu0 0.0
        %1476 = vmatpush1.msra.mxu0 0.0
        %1477 = vmatprep.subr.mxu0 0.0
        %1478 = vmatpush1.msra.mxu0 0.0
        %1479 = vmatprep.subr.mxu0 0.0
        %1480 = vmatpush1.msra.mxu0 0.0
        %1481 = vmatprep.subr.mxu0 0.0
        %1482 = vmatpush1.msra.mxu0 0.0
        %1483 = vmatprep.subr.mxu0 0.0
        %1484 = vmatpush1.msra.mxu0 %v1448
        %1485 = vmatprep.subr.mxu0 0.0
        %1486 = vmatpush2.msra.mxu0 0.0
        %1487 = vmatprep.subr.mxu0 0.0
        %1488 = vmatpush2.msra.mxu0 0.0
        %1489 = vmatprep.subr.mxu0 0.0
        %1490 = vmatpush2.msra.mxu0 0.0
        %1491 = vmatprep.subr.mxu0 0.0
        %1492 = vmatpush2.msra.mxu0 0.0
        %1493 = vmatprep.subr.mxu0 0.0
        %1494 = vmatpush2.msra.mxu0 0.0
        %1495 = vmatprep.subr.mxu0 0.0
        %1496 = vmatpush2.msra.mxu0 0.0
        %1497 = vmatprep.subr.mxu0 0.0
        %1498 = vmatpush2.msra.mxu0 0.0
        %1499 = vmatprep.subr.mxu0 0.0
        %1500 = vmatpush2.msra.mxu0 0.0
        %1501 = vmatprep.subr.mxu0 0.0
        %1502 = vmatpush2.msra.mxu0 0.0
        %1503 = vmatprep.subr.mxu0 0.0
        %1504 = vmatpush2.msra.mxu0 0.0
        %1505 = vmatprep.subr.mxu0 0.0
        %1506 = vmatpush2.msra.mxu0 0.0
        %1507 = vmatprep.subr.mxu0 0.0
        %1508 = vmatpush2.msra.mxu0 0.0
        %1509 = vmatprep.subr.mxu0 0.0
        %1510 = vmatpush2.msra.mxu0 0.0
        %1511 = vmatprep.subr.mxu0 0.0
        %1512 = vmatpush2.msra.mxu0 0.0
        %1513 = vmatprep.subr.mxu0 0.0
        %1514 = vmatpush2.msra.mxu0 0.0
        %1515 = vmatprep.subr.mxu0 0.0
        %1516 = vmatpush2.msra.mxu0 0.0
        %1517 = vmatprep.mubr.f32.mxu0 0.0
        %1518 = vmatmul.mubr.f32.gmra.mxu0 %v1451
        %v1519 = vpop.f32.mrf.mxu0
        %v1520 = vadd.f32 0.0, %v1519
        %v1521 = vpop.f32.mrf.mxu0
        %1522 = vdwg.mxu0
        %v1523 = vld [vmem:[%s9 + $0x8] sm:$0xff]
        %v1525 = vsel %vm1118, %v1520, 0
        %1527 = vmatprep.subr.mxu0 0.0
        %1528 = vmatpush1.msra.mxu0 0.0
        %1529 = vmatprep.subr.mxu0 0.0
        %1530 = vmatpush1.msra.mxu0 0.0
        %1531 = vmatprep.subr.mxu0 0.0
        %1532 = vmatpush1.msra.mxu0 0.0
        %1533 = vmatprep.subr.mxu0 0.0
        %1534 = vmatpush1.msra.mxu0 0.0
        %1535 = vmatprep.subr.mxu0 0.0
        %1536 = vmatpush1.msra.mxu0 0.0
        %1537 = vmatprep.subr.mxu0 0.0
        %1538 = vmatpush1.msra.mxu0 0.0
        %1539 = vmatprep.subr.mxu0 0.0
        %1540 = vmatpush1.msra.mxu0 0.0
        %1541 = vmatprep.subr.mxu0 0.0
        %1542 = vmatpush1.msra.mxu0 0.0
        %1543 = vmatprep.subr.mxu0 0.0
        %1544 = vmatpush1.msra.mxu0 0.0
        %1545 = vmatprep.subr.mxu0 0.0
        %1546 = vmatpush1.msra.mxu0 0.0
        %1547 = vmatprep.subr.mxu0 0.0
        %1548 = vmatpush1.msra.mxu0 0.0
        %1549 = vmatprep.subr.mxu0 0.0
        %1550 = vmatpush1.msra.mxu0 0.0
        %1551 = vmatprep.subr.mxu0 0.0
        %1552 = vmatpush1.msra.mxu0 0.0
        %1553 = vmatprep.subr.mxu0 0.0
        %1554 = vmatpush1.msra.mxu0 0.0
        %1555 = vmatprep.subr.mxu0 0.0
        %1556 = vmatpush1.msra.mxu0 0.0
        %1557 = vmatprep.subr.mxu0 0.0
        %1558 = vmatpush1.msra.mxu0 %v1523
        %1559 = vmatprep.subr.mxu0 0.0
        %1560 = vmatpush2.msra.mxu0 0.0
        %1561 = vmatprep.subr.mxu0 0.0
        %1562 = vmatpush2.msra.mxu0 0.0
        %1563 = vmatprep.subr.mxu0 0.0
        %1564 = vmatpush2.msra.mxu0 0.0
        %1565 = vmatprep.subr.mxu0 0.0
        %1566 = vmatpush2.msra.mxu0 0.0
        %1567 = vmatprep.subr.mxu0 0.0
        %1568 = vmatpush2.msra.mxu0 0.0
        %1569 = vmatprep.subr.mxu0 0.0
        %1570 = vmatpush2.msra.mxu0 0.0
        %1571 = vmatprep.subr.mxu0 0.0
        %1572 = vmatpush2.msra.mxu0 0.0
        %1573 = vmatprep.subr.mxu0 0.0
        %1574 = vmatpush2.msra.mxu0 0.0
        %1575 = vmatprep.subr.mxu0 0.0
        %1576 = vmatpush2.msra.mxu0 0.0
        %1577 = vmatprep.subr.mxu0 0.0
        %1578 = vmatpush2.msra.mxu0 0.0
        %1579 = vmatprep.subr.mxu0 0.0
        %1580 = vmatpush2.msra.mxu0 0.0
        %1581 = vmatprep.subr.mxu0 0.0
        %1582 = vmatpush2.msra.mxu0 0.0
        %1583 = vmatprep.subr.mxu0 0.0
        %1584 = vmatpush2.msra.mxu0 0.0
        %1585 = vmatprep.subr.mxu0 0.0
        %1586 = vmatpush2.msra.mxu0 0.0
        %1587 = vmatprep.subr.mxu0 0.0
        %1588 = vmatpush2.msra.mxu0 0.0
        %1589 = vmatprep.subr.mxu0 0.0
        %1590 = vmatpush2.msra.mxu0 0.0
        %1591 = vmatprep.mubr.f32.mxu0 0.0
        %1592 = vmatmul.mubr.f32.gmra.mxu0 %v1525
        %v1593 = vpop.f32.mrf.mxu0
        %v1594 = vadd.f32 0.0, %v1593
        %v1595 = vpop.f32.mrf.mxu0
        %1596 = vdwg.mxu0
        %v1597 = vadd.f32 %v1354, %v1594
        %v1598 = vsel %vm618, %v1597, 0.0
        %1599 = vadd.xlane.f32.xlu0 %v1598
        %v1600 = vpop.xlane.xlu0 %1599
        %v1601 = vrcp.pop 32.0
        %v1602 = vmul.f32 %v1600, %v1601
        %v1603 = vsub.f32 %v1597, %v1602
        %v1604 = vmul.f32 %v1603, %v1603
        %v1605 = vsel %vm618, %v1604, 0.0
        %1606 = vadd.xlane.f32.xlu0 %v1605
        %v1607 = vpop.xlane.xlu0 %1606
        %v1608 = vmul.f32 %v1607, %v1601
        %v1609 = vadd.f32 %v1608, 1e-05
        %v1610 = vrsqrt.pop %v1609
        %v1611 = vmul.f32 %v1603, %v1610
        %v1612 = vld [vmem:[%s11] sm:$0x1]
        %v1614 = vlaneseq
        %v1615 = vshrl.u32 %v1614, 7
        %v1616 = vsub.s32 0, %v1615
        %v1617 = vrot.slane %v1612, %v1616
        %v1619 = vmul.f32 %v1611, %v1617
        %v1620 = vld [vmem:[%s12] sm:$0x1]
        %v1622 = vlaneseq
        %v1623 = vshrl.u32 %v1622, 7
        %v1624 = vsub.s32 0, %v1623
        %v1625 = vrot.slane %v1620, %v1624
        %v1627 = vadd.f32 %v1619, %v1625
        %1628 = vst.msk [vmem:[%s601] sm:$0xff] %vm618, %v1627
        %s1629 = sand.u32 %s341, 1
        %s1630 = scalar_lea.sflag [#allocation4], %s1629
        %s1631 = sand.u32 %s341, 1
        %s1632 = smul.addr %s1631, 8
        %s1633 = scalar_lea.vmem [#allocation13], %s1632
        %s1634 = sand.u32 %s367, 1
        %s1635 = scalar_lea.sflag [#allocation15], %s1634
        %s1636 = sand.u32 %s367, 1
        %s1637 = smul.addr %s1636, 16
        %s1638 = scalar_lea.vmem [#allocation14], %s1637
        // Predicated region
        $region97: #{tpu_custom_call.1} parent=71 // pred_check
          %p1639 = pneg %p351
        $region98: #{tpu_custom_call.1} parent=71 // pred_check_branch
          %1641 = sbr.rel (%p1639) target = $region100
        $region99: #{tpu_custom_call.1} parent=71 // pred_region
          %s1643 = ssub.s32 128, 128
          %1644 = vsyncadd %s1630, %s1643
          %s1645 = smul.addr %s40, 128
          %s1646 = scalar_lea.hbm %s13, %s1645
          %s1648 = sshll.u32 %s1633, 4
          %s1649 = int_to_ptr.vmem [resolvable:$true] %s1648
          %1651 = dma.vmem_to_hbm [thread:$0]  %s1649, 128, %s1646, %s1630
        $region100: #{tpu_custom_call.1} parent=71 // pred_fallthru
          _
        // Predicated region
        $region101: #{tpu_custom_call.1} parent=71 // pred_check
          %p1652 = pneg %p377
        $region102: #{tpu_custom_call.1} parent=71 // pred_check_branch
          %1654 = sbr.rel (%p1652) target = $region104
        $region103: #{tpu_custom_call.1} parent=71 // pred_region
          %s1656 = ssub.s32 256, 256
          %1657 = vsyncadd %s1635, %s1656
          %s1658 = smul.addr %s40, 128
          %s1659 = scalar_lea.hbm %s14, %s1658
          %s1660 = sshll.u32 %s1638, 4
          %s1661 = int_to_ptr.vmem [resolvable:$true] %s1660
          %1666 = dma.vmem_to_hbm [thread:$0]  %s1661, 256, %s1659, %s1635, 128, 256, 8
        $region104: #{tpu_custom_call.1} parent=71 // pred_fallthru
          _
      $region72: #{tpu_custom_call.1} parent=5 // pred_fallthru
        _
      %p1667 = scmp.le.s32.totalorder 2, %s35
      // Predicated region
      $region105: #{tpu_custom_call.1} parent=5 // pred_check
        %p1668 = pneg %p1667
      $region106: #{tpu_custom_call.1} parent=5 // pred_check_branch
        %1670 = sbr.rel (%p1668) target = $region108
      $region107: #{tpu_custom_call.1} parent=5 // pred_region
        %s1671 = ssub.s32 %s35, 2
        // Predicated region
        $region109: #{tpu_custom_call.1} parent=107 // pred_check
          %p1672 = pneg %p357
        $region110: #{tpu_custom_call.1} parent=107 // pred_check_branch
          %1674 = sbr.rel (%p1672) target = $region112
        $region111: #{tpu_custom_call.1} parent=107 // pred_region
          %s1675 = sand.u32 %s342, 1
          %s1676 = scalar_lea.sflag [#allocation4], %s1675
          %s1677 = sand.u32 %s342, 1
          %s1678 = smul.addr %s1677, 8
          %s1679 = scalar_lea.vmem [#allocation13], %s1678
          %1680 = dma.done %s1676, 128
        $region112: #{tpu_custom_call.1} parent=107 // pred_fallthru
          _
        // Predicated region
        $region113: #{tpu_custom_call.1} parent=107 // pred_check
          %p1681 = pneg %p383
        $region114: #{tpu_custom_call.1} parent=107 // pred_check_branch
          %1683 = sbr.rel (%p1681) target = $region116
        $region115: #{tpu_custom_call.1} parent=107 // pred_region
          %s1684 = sand.u32 %s368, 1
          %s1685 = scalar_lea.sflag [#allocation15], %s1684
          %s1686 = sand.u32 %s368, 1
          %s1687 = smul.addr %s1686, 16
          %s1688 = scalar_lea.vmem [#allocation14], %s1687
          %1689 = dma.done %s1685, 256
        $region116: #{tpu_custom_call.1} parent=107 // pred_fallthru
          _
      $region108: #{tpu_custom_call.1} parent=5 // pred_fallthru
        _
    $region6: #{tpu_custom_call.1} parent=1 // loop_footer
      %s39 = sadd.s32 1, %s35
    $region7: #{tpu_custom_call.1} parent=1 // loop_footer_branch
      %34 = sbr.rel target = $region3
    $region8: #{tpu_custom_call.1} parent=1 // loop_exit
      _
    %1690 = vsyncpa [#allocation3], 1
    %s1691 = scalar_lea.sflag [#allocation3], 1
    %1692 = vsyncpa %s1691, 1
    %1693 = vsyncpa [#allocation6], 1
    %s1694 = scalar_lea.sflag [#allocation6], 1
    %1695 = vsyncpa %s1694, 1
    %1696 = vsyncpa [#allocation9], 1
    %1697 = vsyncpa [#allocation12], 1
    %1698 = vsyncpa [#allocation4], 1
    %s1699 = scalar_lea.sflag [#allocation4], 1
    %1700 = vsyncpa %s1699, 1
    %1701 = vsyncpa [#allocation15], 1
    %s1702 = scalar_lea.sflag [#allocation15], 1
    %1703 = vsyncpa %s1702, 1

</llo_original>
